<compile_context>
chip_gen: v7x
topology: tpu7x:2x2x1
jax: 0.10.0
libtpu: 0.0.40
codegen_flags: <defaults>
</compile_context>

<pallas_src>
import functools

import jax
import jax.numpy as jnp
from jax import lax
from jax.experimental import pallas as pl
from jax.experimental.pallas import tpu as pltpu


def _cbam_kernel(W, pad_off,
                 x_ref, w1_ref, b1_ref, w2t_ref, b2_ref, cmask_ref, wk_ref,
                 out_ref, pf_ref):
    # x_ref   : (1, C, HW)   one batch item, flat lane-dense spatial axis
    # w1_ref  : (C, hid)     first Linear weight^T
    # b1_ref  : (1, hid)     first Linear bias
    # w2t_ref : (C, hid)     second Linear weight (torch layout (C, hid))
    # b2_ref  : (C, 1)       second Linear bias
    # cmask_ref: (7, HW)     per-dj column validity mask (kills row wraparound)
    # wk_ref  : (98,) SMEM   conv weights flattened row-major (chan, di, dj)
    # pf_ref  : (2, 2*pad_off+HW) VMEM scratch, zero-padded pooled rows
    x = x_ref[0].astype(jnp.float32)                       # (C, HW)
    C, HW = x.shape
    w1 = w1_ref[...]                                       # (C, hid)
    b1 = b1_ref[...]                                       # (1, hid)
    w2t = w2t_ref[...]                                     # (C, hid)
    b2 = b2_ref[...]                                       # (C, 1)

    # ---- ChannelGate: global avg/max pool over HW + squeeze-excite MLP.
    avg_col = jnp.sum(x, axis=1, keepdims=True) * (1.0 / HW)        # (C, 1)
    max_col = jnp.max(x, axis=1, keepdims=True)                     # (C, 1)
    h_avg = jnp.maximum(jnp.sum(w1 * avg_col, axis=0, keepdims=True) + b1, 0.0)
    h_max = jnp.maximum(jnp.sum(w1 * max_col, axis=0, keepdims=True) + b1, 0.0)
    # second Linear shared across the two branches (affine => sum after ReLU)
    att = jnp.sum(w2t * (h_avg + h_max), axis=1, keepdims=True) + 2.0 * b2
    xcg = x * jax.nn.sigmoid(att)                                   # (C, HW)

    # ---- ChannelPool: per-pixel max / mean over channels (flat rows).
    cmax = jnp.max(xcg, axis=0, keepdims=True)                      # (1, HW)
    cmean = jnp.sum(xcg, axis=0, keepdims=True) * (1.0 / C)         # (1, HW)

    # ---- SpatialGate: 7x7 "same" conv on the two flat pooled rows.
    # Zeroed scratch; pooled rows live at a 128-aligned lane offset so the
    # +/-3-row taps read real zeros above/below the image.  Column wrap across
    # row ends is removed by the precomputed per-dj mask.
    pf_ref[...] = jnp.zeros_like(pf_ref)
    pf_ref[0:1, pad_off:pad_off + HW] = cmax
    pf_ref[1:2, pad_off:pad_off + HW] = cmean

    acc = jnp.zeros((1, HW), jnp.float32)
    for bj in range(7):                          # column offset dj = bj - 3
        b = bj - 3
        part = jnp.zeros((1, HW), jnp.float32)
        for ai in range(7):                      # row offset di = ai - 3
            a = ai - 3
            start = pad_off + a * W + b          # static lane offset
            win = pf_ref[:, start:start + HW]    # (2, HW): [max; mean]
            part = part + win[0:1] * wk_ref[ai * 7 + bj]        # max channel
            part = part + win[1:2] * wk_ref[49 + ai * 7 + bj]   # mean channel
        acc = acc + part * cmask_ref[bj:bj + 1, :]
    sp = jax.nn.sigmoid(acc)                                        # (1, HW)

    out_ref[0] = (xcg * sp).astype(out_ref.dtype)


def cbam_pallas(x, w1, b1, w2t, b2col, wconv):
    N, C, H, W = x.shape
    HW = H * W
    hid = w1.shape[1]
    x2 = x.reshape(N, C, HW)                    # contiguous reshape, no copy
    b1_2 = b1.reshape(1, hid)

    # Per-dj column-validity masks (0 where j+dj falls outside [0, W)).
    col = jnp.arange(HW, dtype=jnp.int32) % W
    cmask = jnp.stack(
        [((col + b >= 0) & (col + b < W)).astype(jnp.float32) for b in range(-3, 4)],
        axis=0)                                 # (7, HW)
    wk = wconv.astype(jnp.float32).reshape(-1)  # (98,) row-major (chan, di, dj)

    pad_off = ((3 * W + 3 + 127) // 128) * 128  # 128-aligned, >= max |di*W + dj|
    pf_w = 2 * pad_off + HW

    kernel = functools.partial(_cbam_kernel, W, pad_off)
    out2 = pl.pallas_call(
        kernel,
        out_shape=jax.ShapeDtypeStruct((N, C, HW), x.dtype),
        grid_spec=pltpu.PrefetchScalarGridSpec(
            num_scalar_prefetch=0,
            grid=(N,),
            in_specs=[pl.BlockSpec((1, C, HW), lambda b: (b, 0, 0)),
                      pl.BlockSpec((C, hid), lambda b: (0, 0)),
                      pl.BlockSpec((1, hid), lambda b: (0, 0)),
                      pl.BlockSpec((C, hid), lambda b: (0, 0)),
                      pl.BlockSpec((C, 1), lambda b: (0, 0)),
                      pl.BlockSpec((7, HW), lambda b: (0, 0)),
                      pl.BlockSpec(memory_space=pltpu.MemorySpace.SMEM)],
            out_specs=pl.BlockSpec((1, C, HW), lambda b: (b, 0, 0)),
            scratch_shapes=[pltpu.VMEM((2, pf_w), jnp.float32)]),
        compiler_params=pltpu.CompilerParams(dimension_semantics=("parallel",)),
    )(x2, w1, b1_2, w2t, b2col, cmask, wk)

    return out2.reshape(N, C, H, W)


def cbam_ref(x, w1, b1, w2t, b2col, wconv):
    # pure-JAX reference mirroring the PyTorch forward
    avg = jnp.mean(x, axis=(2, 3))                        # (N, C)
    mx = jnp.max(x, axis=(2, 3))                          # (N, C)

    def mlp(v):
        h = jnp.maximum(v @ w1 + b1, 0.0)
        return h @ w2t.T + b2col[:, 0]

    att = mlp(avg) + mlp(mx)
    scale = jax.nn.sigmoid(att)[:, :, None, None]
    xcg = x * scale
    cp = jnp.concatenate([jnp.max(xcg, axis=1, keepdims=True),
                          jnp.mean(xcg, axis=1, keepdims=True)], axis=1)
    conv = lax.conv_general_dilated(cp, wconv, (1, 1), [(3, 3), (3, 3)],
                                    dimension_numbers=('NCHW', 'OIHW', 'NCHW'))
    return xcg * jax.nn.sigmoid(conv)


if __name__ == "__main__":
    key = jax.random.PRNGKey(0)
    N, C, H, W = 2, 32, 16, 16
    reduction = 16
    hid = C // reduction

    ks = jax.random.split(key, 6)
    x = jax.random.normal(ks[0], (N, C, H, W), jnp.float32)
    # MLP params: Linear(C, C//r) -> ReLU -> Linear(C//r, C), both with bias.
    w1 = jax.random.normal(ks[1], (C, hid), jnp.float32) * 0.2     # first Linear weight^T
    b1 = jax.random.normal(ks[2], (hid,), jnp.float32) * 0.1
    w2t = jax.random.normal(ks[3], (C, hid), jnp.float32) * 0.2    # second Linear weight (C, hid)
    b2col = jax.random.normal(ks[4], (C, 1), jnp.float32) * 0.1
    # SpatialGate conv: Conv2d(2, 1, 7, padding=3, bias=False), no BN, no ReLU.
    wconv = jax.random.normal(ks[5], (1, 2, 7, 7), jnp.float32) * 0.1

    out = cbam_pallas(x, w1, b1, w2t, b2col, wconv)
    out = jax.block_until_ready(out)

    ref = cbam_ref(x, w1, b1, w2t, b2col, wconv)
    err = float(jnp.max(jnp.abs(out - ref)))
    assert jnp.allclose(out, ref, atol=1e-4, rtol=1e-4), f"max abs err {err}"
    print("KERNEL_OK")
</pallas_src>

<mosaic_0001>
module attributes {stable_mosaic.version = 11 : i64} {
  func.func @_cbam_kernel(%arg0: i32, %arg1: memref<1x32x256xf32, #tpu.memory_space<vmem>>, %arg2: memref<32x2xf32, #tpu.memory_space<vmem>>, %arg3: memref<1x2xf32, #tpu.memory_space<vmem>>, %arg4: memref<32x2xf32, #tpu.memory_space<vmem>>, %arg5: memref<32x1xf32, #tpu.memory_space<vmem>>, %arg6: memref<7x256xf32, #tpu.memory_space<vmem>>, %arg7: memref<98xf32, #tpu.memory_space<smem>>, %arg8: memref<1x32x256xf32, #tpu.memory_space<vmem>>, %arg9: memref<2x512xf32, #tpu.memory_space<vmem>>) attributes {dimension_semantics = [#tpu.dimension_semantics<parallel>], iteration_bounds = array<i64: 2>, scalar_prefetch = 0 : i64, scratch_operands = 1 : i64, tpu.core_type = #tpu.core_type<tc>, window_params = [{transform_indices = @transform_0, window_bounds = array<i64: 1, 32, 256>}, {pipeline_mode = #tpu.pipeline_mode<synchronous>, transform_indices = @transform_1, window_bounds = array<i64: 32, 2>}, {pipeline_mode = #tpu.pipeline_mode<synchronous>, transform_indices = @transform_2, window_bounds = array<i64: 1, 2>}, {pipeline_mode = #tpu.pipeline_mode<synchronous>, transform_indices = @transform_3, window_bounds = array<i64: 32, 2>}, {pipeline_mode = #tpu.pipeline_mode<synchronous>, transform_indices = @transform_4, window_bounds = array<i64: 32, 1>}, {pipeline_mode = #tpu.pipeline_mode<synchronous>, transform_indices = @transform_5, window_bounds = array<i64: 7, 256>}, {transform_indices = @transform_6, window_bounds = array<i64: 98>}, {transform_indices = @transform_7, window_bounds = array<i64: 1, 32, 256>}]} {
    %c0 = arith.constant 0 : index
    %c0_0 = arith.constant 0 : index
    %c0_1 = arith.constant 0 : index
    %0 = vector.load %arg1[%c0, %c0_0, %c0_1] : memref<1x32x256xf32, #tpu.memory_space<vmem>>, vector<1x32x256xf32>
    %1 = vector.shape_cast %0 : vector<1x32x256xf32> to vector<32x256xf32>
    %c0_2 = arith.constant 0 : index
    %c0_3 = arith.constant 0 : index
    %2 = vector.load %arg2[%c0_2, %c0_3] : memref<32x2xf32, #tpu.memory_space<vmem>>, vector<32x2xf32>
    %c0_4 = arith.constant 0 : index
    %c0_5 = arith.constant 0 : index
    %3 = vector.load %arg3[%c0_4, %c0_5] : memref<1x2xf32, #tpu.memory_space<vmem>>, vector<1x2xf32>
    %c0_6 = arith.constant 0 : index
    %c0_7 = arith.constant 0 : index
    %4 = vector.load %arg4[%c0_6, %c0_7] : memref<32x2xf32, #tpu.memory_space<vmem>>, vector<32x2xf32>
    %c0_8 = arith.constant 0 : index
    %c0_9 = arith.constant 0 : index
    %5 = vector.load %arg5[%c0_8, %c0_9] : memref<32x1xf32, #tpu.memory_space<vmem>>, vector<32x1xf32>
    %cst = arith.constant dense<0.000000e+00> : vector<32xf32>
    %6 = vector.multi_reduction <add>, %1, %cst [1] : vector<32x256xf32> to vector<32xf32>
    %7 = vector.shape_cast %6 : vector<32xf32> to vector<32x1xf32>
    %cst_10 = arith.constant 3.906250e-03 : f32
    %8 = vector.broadcast %cst_10 : f32 to vector<32x1xf32>
    %9 = arith.mulf %7, %8 : vector<32x1xf32>
    %cst_11 = arith.constant dense<0xFF800000> : vector<32xf32>
    %10 = vector.multi_reduction <maximumf>, %1, %cst_11 [1] : vector<32x256xf32> to vector<32xf32>
    %11 = vector.shape_cast %10 : vector<32xf32> to vector<32x1xf32>
    %12 = vector.broadcast %9 : vector<32x1xf32> to vector<32x2xf32>
    %13 = arith.mulf %2, %12 : vector<32x2xf32>
    %cst_12 = arith.constant dense<0.000000e+00> : vector<2xf32>
    %14 = vector.multi_reduction <add>, %13, %cst_12 [0] : vector<32x2xf32> to vector<2xf32>
    %15 = vector.shape_cast %14 : vector<2xf32> to vector<1x2xf32>
    %16 = arith.addf %15, %3 : vector<1x2xf32>
    %cst_13 = arith.constant 0.000000e+00 : f32
    %17 = vector.broadcast %cst_13 : f32 to vector<1x2xf32>
    %18 = arith.maximumf %16, %17 : vector<1x2xf32>
    %19 = vector.broadcast %11 : vector<32x1xf32> to vector<32x2xf32>
    %20 = arith.mulf %2, %19 : vector<32x2xf32>
    %cst_14 = arith.constant dense<0.000000e+00> : vector<2xf32>
    %21 = vector.multi_reduction <add>, %20, %cst_14 [0] : vector<32x2xf32> to vector<2xf32>
    %22 = vector.shape_cast %21 : vector<2xf32> to vector<1x2xf32>
    %23 = arith.addf %22, %3 : vector<1x2xf32>
    %cst_15 = arith.constant 0.000000e+00 : f32
    %24 = vector.broadcast %cst_15 : f32 to vector<1x2xf32>
    %25 = arith.maximumf %23, %24 : vector<1x2xf32>
    %26 = arith.addf %18, %25 : vector<1x2xf32>
    %27 = vector.broadcast %26 : vector<1x2xf32> to vector<32x2xf32>
    %28 = arith.mulf %4, %27 : vector<32x2xf32>
    %cst_16 = arith.constant dense<0.000000e+00> : vector<32xf32>
    %29 = vector.multi_reduction <add>, %28, %cst_16 [1] : vector<32x2xf32> to vector<32xf32>
    %30 = vector.shape_cast %29 : vector<32xf32> to vector<32x1xf32>
    %cst_17 = arith.constant 2.000000e+00 : f32
    %31 = vector.broadcast %cst_17 : f32 to vector<32x1xf32>
    %32 = arith.mulf %31, %5 : vector<32x1xf32>
    %33 = arith.addf %30, %32 : vector<32x1xf32>
    %34 = arith.negf %33 : vector<32x1xf32>
    %35 = math.exp %34 : vector<32x1xf32>
    %cst_18 = arith.constant 1.000000e+00 : f32
    %36 = vector.broadcast %cst_18 : f32 to vector<32x1xf32>
    %37 = arith.addf %36, %35 : vector<32x1xf32>
    %38 = arith.divf %36, %37 : vector<32x1xf32>
    %39 = vector.broadcast %38 : vector<32x1xf32> to vector<32x256xf32>
    %40 = arith.mulf %1, %39 : vector<32x256xf32>
    %cst_19 = arith.constant dense<0xFF800000> : vector<256xf32>
    %41 = vector.multi_reduction <maximumf>, %40, %cst_19 [0] : vector<32x256xf32> to vector<256xf32>
    %42 = vector.shape_cast %41 : vector<256xf32> to vector<1x256xf32>
    %cst_20 = arith.constant dense<0.000000e+00> : vector<256xf32>
    %43 = vector.multi_reduction <add>, %40, %cst_20 [0] : vector<32x256xf32> to vector<256xf32>
    %44 = vector.shape_cast %43 : vector<256xf32> to vector<1x256xf32>
    %cst_21 = arith.constant 3.125000e-02 : f32
    %45 = vector.broadcast %cst_21 : f32 to vector<1x256xf32>
    %46 = arith.mulf %44, %45 : vector<1x256xf32>
    %cst_22 = arith.constant 0.000000e+00 : f32
    %47 = vector.broadcast %cst_22 : f32 to vector<2x512xf32>
    %c0_23 = arith.constant 0 : index
    %c0_24 = arith.constant 0 : index
    %48 = vector.load %arg9[%c0_23, %c0_24] : memref<2x512xf32, #tpu.memory_space<vmem>>, vector<2x512xf32>
    tpu.vector_store %arg9[%c0_23, %c0_24], %47 {strides = array<i32>} : memref<2x512xf32, #tpu.memory_space<vmem>>, vector<2x512xf32>,
    %c0_25 = arith.constant 0 : index
    %c128 = arith.constant 128 : index
    %49 = vector.load %arg9[%c0_25, %c128] : memref<2x512xf32, #tpu.memory_space<vmem>>, vector<1x256xf32>
    tpu.vector_store %arg9[%c0_25, %c128], %42 {strides = array<i32>} : memref<2x512xf32, #tpu.memory_space<vmem>>, vector<1x256xf32>,
    %c1 = arith.constant 1 : index
    %c128_26 = arith.constant 128 : index
    %50 = vector.load %arg9[%c1, %c128_26] : memref<2x512xf32, #tpu.memory_space<vmem>>, vector<1x256xf32>
    tpu.vector_store %arg9[%c1, %c128_26], %46 {strides = array<i32>} : memref<2x512xf32, #tpu.memory_space<vmem>>, vector<1x256xf32>,
    %cst_27 = arith.constant 0.000000e+00 : f32
    %51 = vector.broadcast %cst_27 : f32 to vector<1x256xf32>
    %cst_28 = arith.constant 0.000000e+00 : f32
    %52 = vector.broadcast %cst_28 : f32 to vector<1x256xf32>
    %c0_29 = arith.constant 0 : index
    %c77 = arith.constant 77 : index
    %53 = vector.load %arg9[%c0_29, %c77] : memref<2x512xf32, #tpu.memory_space<vmem>>, vector<2x256xf32>
    %54 = vector.extract_strided_slice %53 {offsets = [0, 0], sizes = [1, 256], strides = [1, 1]} : vector<2x256xf32> to vector<1x256xf32>
    %c0_30 = arith.constant 0 : index
    %55 = memref.load %arg7[%c0_30] : memref<98xf32, #tpu.memory_space<smem>>
    %56 = vector.broadcast %55 : f32 to vector<1x256xf32>
    %57 = arith.mulf %54, %56 : vector<1x256xf32>
    %58 = arith.addf %52, %57 : vector<1x256xf32>
    %59 = vector.extract_strided_slice %53 {offsets = [1, 0], sizes = [1, 256], strides = [1, 1]} : vector<2x256xf32> to vector<1x256xf32>
    %c49 = arith.constant 49 : index
    %60 = memref.load %arg7[%c49] : memref<98xf32, #tpu.memory_space<smem>>
    %61 = vector.broadcast %60 : f32 to vector<1x256xf32>
    %62 = arith.mulf %59, %61 : vector<1x256xf32>
    %63 = arith.addf %58, %62 : vector<1x256xf32>
    %c0_31 = arith.constant 0 : index
    %c93 = arith.constant 93 : index
    %64 = vector.load %arg9[%c0_31, %c93] : memref<2x512xf32, #tpu.memory_space<vmem>>, vector<2x256xf32>
    %65 = vector.extract_strided_slice %64 {offsets = [0, 0], sizes = [1, 256], strides = [1, 1]} : vector<2x256xf32> to vector<1x256xf32>
    %c7 = arith.constant 7 : index
    %66 = memref.load %arg7[%c7] : memref<98xf32, #tpu.memory_space<smem>>
    %67 = vector.broadcast %66 : f32 to vector<1x256xf32>
    %68 = arith.mulf %65, %67 : vector<1x256xf32>
    %69 = arith.addf %63, %68 : vector<1x256xf32>
    %70 = vector.extract_strided_slice %64 {offsets = [1, 0], sizes = [1, 256], strides = [1, 1]} : vector<2x256xf32> to vector<1x256xf32>
    %c56 = arith.constant 56 : index
    %71 = memref.load %arg7[%c56] : memref<98xf32, #tpu.memory_space<smem>>
    %72 = vector.broadcast %71 : f32 to vector<1x256xf32>
    %73 = arith.mulf %70, %72 : vector<1x256xf32>
    %74 = arith.addf %69, %73 : vector<1x256xf32>
    %c0_32 = arith.constant 0 : index
    %c109 = arith.constant 109 : index
    %75 = vector.load %arg9[%c0_32, %c109] : memref<2x512xf32, #tpu.memory_space<vmem>>, vector<2x256xf32>
    %76 = vector.extract_strided_slice %75 {offsets = [0, 0], sizes = [1, 256], strides = [1, 1]} : vector<2x256xf32> to vector<1x256xf32>
    %c14 = arith.constant 14 : index
    %77 = memref.load %arg7[%c14] : memref<98xf32, #tpu.memory_space<smem>>
    %78 = vector.broadcast %77 : f32 to vector<1x256xf32>
    %79 = arith.mulf %76, %78 : vector<1x256xf32>
    %80 = arith.addf %74, %79 : vector<1x256xf32>
    %81 = vector.extract_strided_slice %75 {offsets = [1, 0], sizes = [1, 256], strides = [1, 1]} : vector<2x256xf32> to vector<1x256xf32>
    %c63 = arith.constant 63 : index
    %82 = memref.load %arg7[%c63] : memref<98xf32, #tpu.memory_space<smem>>
    %83 = vector.broadcast %82 : f32 to vector<1x256xf32>
    %84 = arith.mulf %81, %83 : vector<1x256xf32>
    %85 = arith.addf %80, %84 : vector<1x256xf32>
    %c0_33 = arith.constant 0 : index
    %c125 = arith.constant 125 : index
    %86 = vector.load %arg9[%c0_33, %c125] : memref<2x512xf32, #tpu.memory_space<vmem>>, vector<2x256xf32>
    %87 = vector.extract_strided_slice %86 {offsets = [0, 0], sizes = [1, 256], strides = [1, 1]} : vector<2x256xf32> to vector<1x256xf32>
    %c21 = arith.constant 21 : index
    %88 = memref.load %arg7[%c21] : memref<98xf32, #tpu.memory_space<smem>>
    %89 = vector.broadcast %88 : f32 to vector<1x256xf32>
    %90 = arith.mulf %87, %89 : vector<1x256xf32>
    %91 = arith.addf %85, %90 : vector<1x256xf32>
    %92 = vector.extract_strided_slice %86 {offsets = [1, 0], sizes = [1, 256], strides = [1, 1]} : vector<2x256xf32> to vector<1x256xf32>
    %c70 = arith.constant 70 : index
    %93 = memref.load %arg7[%c70] : memref<98xf32, #tpu.memory_space<smem>>
    %94 = vector.broadcast %93 : f32 to vector<1x256xf32>
    %95 = arith.mulf %92, %94 : vector<1x256xf32>
    %96 = arith.addf %91, %95 : vector<1x256xf32>
    %c0_34 = arith.constant 0 : index
    %c141 = arith.constant 141 : index
    %97 = vector.load %arg9[%c0_34, %c141] : memref<2x512xf32, #tpu.memory_space<vmem>>, vector<2x256xf32>
    %98 = vector.extract_strided_slice %97 {offsets = [0, 0], sizes = [1, 256], strides = [1, 1]} : vector<2x256xf32> to vector<1x256xf32>
    %c28 = arith.constant 28 : index
    %99 = memref.load %arg7[%c28] : memref<98xf32, #tpu.memory_space<smem>>
    %100 = vector.broadcast %99 : f32 to vector<1x256xf32>
    %101 = arith.mulf %98, %100 : vector<1x256xf32>
    %102 = arith.addf %96, %101 : vector<1x256xf32>
    %103 = vector.extract_strided_slice %97 {offsets = [1, 0], sizes = [1, 256], strides = [1, 1]} : vector<2x256xf32> to vector<1x256xf32>
    %c77_35 = arith.constant 77 : index
    %104 = memref.load %arg7[%c77_35] : memref<98xf32, #tpu.memory_space<smem>>
    %105 = vector.broadcast %104 : f32 to vector<1x256xf32>
    %106 = arith.mulf %103, %105 : vector<1x256xf32>
    %107 = arith.addf %102, %106 : vector<1x256xf32>
    %c0_36 = arith.constant 0 : index
    %c157 = arith.constant 157 : index
    %108 = vector.load %arg9[%c0_36, %c157] : memref<2x512xf32, #tpu.memory_space<vmem>>, vector<2x256xf32>
    %109 = vector.extract_strided_slice %108 {offsets = [0, 0], sizes = [1, 256], strides = [1, 1]} : vector<2x256xf32> to vector<1x256xf32>
    %c35 = arith.constant 35 : index
    %110 = memref.load %arg7[%c35] : memref<98xf32, #tpu.memory_space<smem>>
    %111 = vector.broadcast %110 : f32 to vector<1x256xf32>
    %112 = arith.mulf %109, %111 : vector<1x256xf32>
    %113 = arith.addf %107, %112 : vector<1x256xf32>
    %114 = vector.extract_strided_slice %108 {offsets = [1, 0], sizes = [1, 256], strides = [1, 1]} : vector<2x256xf32> to vector<1x256xf32>
    %c84 = arith.constant 84 : index
    %115 = memref.load %arg7[%c84] : memref<98xf32, #tpu.memory_space<smem>>
    %116 = vector.broadcast %115 : f32 to vector<1x256xf32>
    %117 = arith.mulf %114, %116 : vector<1x256xf32>
    %118 = arith.addf %113, %117 : vector<1x256xf32>
    %c0_37 = arith.constant 0 : index
    %c173 = arith.constant 173 : index
    %119 = vector.load %arg9[%c0_37, %c173] : memref<2x512xf32, #tpu.memory_space<vmem>>, vector<2x256xf32>
    %120 = vector.extract_strided_slice %119 {offsets = [0, 0], sizes = [1, 256], strides = [1, 1]} : vector<2x256xf32> to vector<1x256xf32>
    %c42 = arith.constant 42 : index
    %121 = memref.load %arg7[%c42] : memref<98xf32, #tpu.memory_space<smem>>
    %122 = vector.broadcast %121 : f32 to vector<1x256xf32>
    %123 = arith.mulf %120, %122 : vector<1x256xf32>
    %124 = arith.addf %118, %123 : vector<1x256xf32>
    %125 = vector.extract_strided_slice %119 {offsets = [1, 0], sizes = [1, 256], strides = [1, 1]} : vector<2x256xf32> to vector<1x256xf32>
    %c91 = arith.constant 91 : index
    %126 = memref.load %arg7[%c91] : memref<98xf32, #tpu.memory_space<smem>>
    %127 = vector.broadcast %126 : f32 to vector<1x256xf32>
    %128 = arith.mulf %125, %127 : vector<1x256xf32>
    %129 = arith.addf %124, %128 : vector<1x256xf32>
    %c0_38 = arith.constant 0 : index
    %c0_39 = arith.constant 0 : index
    %130 = vector.load %arg6[%c0_38, %c0_39] : memref<7x256xf32, #tpu.memory_space<vmem>>, vector<1x256xf32>
    %131 = arith.mulf %129, %130 : vector<1x256xf32>
    %132 = arith.addf %51, %131 : vector<1x256xf32>
    %cst_40 = arith.constant 0.000000e+00 : f32
    %133 = vector.broadcast %cst_40 : f32 to vector<1x256xf32>
    %c0_41 = arith.constant 0 : index
    %c78 = arith.constant 78 : index
    %134 = vector.load %arg9[%c0_41, %c78] : memref<2x512xf32, #tpu.memory_space<vmem>>, vector<2x256xf32>
    %135 = vector.extract_strided_slice %134 {offsets = [0, 0], sizes = [1, 256], strides = [1, 1]} : vector<2x256xf32> to vector<1x256xf32>
    %c1_42 = arith.constant 1 : index
    %136 = memref.load %arg7[%c1_42] : memref<98xf32, #tpu.memory_space<smem>>
    %137 = vector.broadcast %136 : f32 to vector<1x256xf32>
    %138 = arith.mulf %135, %137 : vector<1x256xf32>
    %139 = arith.addf %133, %138 : vector<1x256xf32>
    %140 = vector.extract_strided_slice %134 {offsets = [1, 0], sizes = [1, 256], strides = [1, 1]} : vector<2x256xf32> to vector<1x256xf32>
    %c50 = arith.constant 50 : index
    %141 = memref.load %arg7[%c50] : memref<98xf32, #tpu.memory_space<smem>>
    %142 = vector.broadcast %141 : f32 to vector<1x256xf32>
    %143 = arith.mulf %140, %142 : vector<1x256xf32>
    %144 = arith.addf %139, %143 : vector<1x256xf32>
    %c0_43 = arith.constant 0 : index
    %c94 = arith.constant 94 : index
    %145 = vector.load %arg9[%c0_43, %c94] : memref<2x512xf32, #tpu.memory_space<vmem>>, vector<2x256xf32>
    %146 = vector.extract_strided_slice %145 {offsets = [0, 0], sizes = [1, 256], strides = [1, 1]} : vector<2x256xf32> to vector<1x256xf32>
    %c8 = arith.constant 8 : index
    %147 = memref.load %arg7[%c8] : memref<98xf32, #tpu.memory_space<smem>>
    %148 = vector.broadcast %147 : f32 to vector<1x256xf32>
    %149 = arith.mulf %146, %148 : vector<1x256xf32>
    %150 = arith.addf %144, %149 : vector<1x256xf32>
    %151 = vector.extract_strided_slice %145 {offsets = [1, 0], sizes = [1, 256], strides = [1, 1]} : vector<2x256xf32> to vector<1x256xf32>
    %c57 = arith.constant 57 : index
    %152 = memref.load %arg7[%c57] : memref<98xf32, #tpu.memory_space<smem>>
    %153 = vector.broadcast %152 : f32 to vector<1x256xf32>
    %154 = arith.mulf %151, %153 : vector<1x256xf32>
    %155 = arith.addf %150, %154 : vector<1x256xf32>
    %c0_44 = arith.constant 0 : index
    %c110 = arith.constant 110 : index
    %156 = vector.load %arg9[%c0_44, %c110] : memref<2x512xf32, #tpu.memory_space<vmem>>, vector<2x256xf32>
    %157 = vector.extract_strided_slice %156 {offsets = [0, 0], sizes = [1, 256], strides = [1, 1]} : vector<2x256xf32> to vector<1x256xf32>
    %c15 = arith.constant 15 : index
    %158 = memref.load %arg7[%c15] : memref<98xf32, #tpu.memory_space<smem>>
    %159 = vector.broadcast %158 : f32 to vector<1x256xf32>
    %160 = arith.mulf %157, %159 : vector<1x256xf32>
    %161 = arith.addf %155, %160 : vector<1x256xf32>
    %162 = vector.extract_strided_slice %156 {offsets = [1, 0], sizes = [1, 256], strides = [1, 1]} : vector<2x256xf32> to vector<1x256xf32>
    %c64 = arith.constant 64 : index
    %163 = memref.load %arg7[%c64] : memref<98xf32, #tpu.memory_space<smem>>
    %164 = vector.broadcast %163 : f32 to vector<1x256xf32>
    %165 = arith.mulf %162, %164 : vector<1x256xf32>
    %166 = arith.addf %161, %165 : vector<1x256xf32>
    %c0_45 = arith.constant 0 : index
    %c126 = arith.constant 126 : index
    %167 = vector.load %arg9[%c0_45, %c126] : memref<2x512xf32, #tpu.memory_space<vmem>>, vector<2x256xf32>
    %168 = vector.extract_strided_slice %167 {offsets = [0, 0], sizes = [1, 256], strides = [1, 1]} : vector<2x256xf32> to vector<1x256xf32>
    %c22 = arith.constant 22 : index
    %169 = memref.load %arg7[%c22] : memref<98xf32, #tpu.memory_space<smem>>
    %170 = vector.broadcast %169 : f32 to vector<1x256xf32>
    %171 = arith.mulf %168, %170 : vector<1x256xf32>
    %172 = arith.addf %166, %171 : vector<1x256xf32>
    %173 = vector.extract_strided_slice %167 {offsets = [1, 0], sizes = [1, 256], strides = [1, 1]} : vector<2x256xf32> to vector<1x256xf32>
    %c71 = arith.constant 71 : index
    %174 = memref.load %arg7[%c71] : memref<98xf32, #tpu.memory_space<smem>>
    %175 = vector.broadcast %174 : f32 to vector<1x256xf32>
    %176 = arith.mulf %173, %175 : vector<1x256xf32>
    %177 = arith.addf %172, %176 : vector<1x256xf32>
    %c0_46 = arith.constant 0 : index
    %c142 = arith.constant 142 : index
    %178 = vector.load %arg9[%c0_46, %c142] : memref<2x512xf32, #tpu.memory_space<vmem>>, vector<2x256xf32>
    %179 = vector.extract_strided_slice %178 {offsets = [0, 0], sizes = [1, 256], strides = [1, 1]} : vector<2x256xf32> to vector<1x256xf32>
    %c29 = arith.constant 29 : index
    %180 = memref.load %arg7[%c29] : memref<98xf32, #tpu.memory_space<smem>>
    %181 = vector.broadcast %180 : f32 to vector<1x256xf32>
    %182 = arith.mulf %179, %181 : vector<1x256xf32>
    %183 = arith.addf %177, %182 : vector<1x256xf32>
    %184 = vector.extract_strided_slice %178 {offsets = [1, 0], sizes = [1, 256], strides = [1, 1]} : vector<2x256xf32> to vector<1x256xf32>
    %c78_47 = arith.constant 78 : index
    %185 = memref.load %arg7[%c78_47] : memref<98xf32, #tpu.memory_space<smem>>
    %186 = vector.broadcast %185 : f32 to vector<1x256xf32>
    %187 = arith.mulf %184, %186 : vector<1x256xf32>
    %188 = arith.addf %183, %187 : vector<1x256xf32>
    %c0_48 = arith.constant 0 : index
    %c158 = arith.constant 158 : index
    %189 = vector.load %arg9[%c0_48, %c158] : memref<2x512xf32, #tpu.memory_space<vmem>>, vector<2x256xf32>
    %190 = vector.extract_strided_slice %189 {offsets = [0, 0], sizes = [1, 256], strides = [1, 1]} : vector<2x256xf32> to vector<1x256xf32>
    %c36 = arith.constant 36 : index
    %191 = memref.load %arg7[%c36] : memref<98xf32, #tpu.memory_space<smem>>
    %192 = vector.broadcast %191 : f32 to vector<1x256xf32>
    %193 = arith.mulf %190, %192 : vector<1x256xf32>
    %194 = arith.addf %188, %193 : vector<1x256xf32>
    %195 = vector.extract_strided_slice %189 {offsets = [1, 0], sizes = [1, 256], strides = [1, 1]} : vector<2x256xf32> to vector<1x256xf32>
    %c85 = arith.constant 85 : index
    %196 = memref.load %arg7[%c85] : memref<98xf32, #tpu.memory_space<smem>>
    %197 = vector.broadcast %196 : f32 to vector<1x256xf32>
    %198 = arith.mulf %195, %197 : vector<1x256xf32>
    %199 = arith.addf %194, %198 : vector<1x256xf32>
    %c0_49 = arith.constant 0 : index
    %c174 = arith.constant 174 : index
    %200 = vector.load %arg9[%c0_49, %c174] : memref<2x512xf32, #tpu.memory_space<vmem>>, vector<2x256xf32>
    %201 = vector.extract_strided_slice %200 {offsets = [0, 0], sizes = [1, 256], strides = [1, 1]} : vector<2x256xf32> to vector<1x256xf32>
    %c43 = arith.constant 43 : index
    %202 = memref.load %arg7[%c43] : memref<98xf32, #tpu.memory_space<smem>>
    %203 = vector.broadcast %202 : f32 to vector<1x256xf32>
    %204 = arith.mulf %201, %203 : vector<1x256xf32>
    %205 = arith.addf %199, %204 : vector<1x256xf32>
    %206 = vector.extract_strided_slice %200 {offsets = [1, 0], sizes = [1, 256], strides = [1, 1]} : vector<2x256xf32> to vector<1x256xf32>
    %c92 = arith.constant 92 : index
    %207 = memref.load %arg7[%c92] : memref<98xf32, #tpu.memory_space<smem>>
    %208 = vector.broadcast %207 : f32 to vector<1x256xf32>
    %209 = arith.mulf %206, %208 : vector<1x256xf32>
    %210 = arith.addf %205, %209 : vector<1x256xf32>
    %c1_50 = arith.constant 1 : index
    %c0_51 = arith.constant 0 : index
    %211 = vector.load %arg6[%c1_50, %c0_51] : memref<7x256xf32, #tpu.memory_space<vmem>>, vector<1x256xf32>
    %212 = arith.mulf %210, %211 : vector<1x256xf32>
    %213 = arith.addf %132, %212 : vector<1x256xf32>
    %cst_52 = arith.constant 0.000000e+00 : f32
    %214 = vector.broadcast %cst_52 : f32 to vector<1x256xf32>
    %c0_53 = arith.constant 0 : index
    %c79 = arith.constant 79 : index
    %215 = vector.load %arg9[%c0_53, %c79] : memref<2x512xf32, #tpu.memory_space<vmem>>, vector<2x256xf32>
    %216 = vector.extract_strided_slice %215 {offsets = [0, 0], sizes = [1, 256], strides = [1, 1]} : vector<2x256xf32> to vector<1x256xf32>
    %c2 = arith.constant 2 : index
    %217 = memref.load %arg7[%c2] : memref<98xf32, #tpu.memory_space<smem>>
    %218 = vector.broadcast %217 : f32 to vector<1x256xf32>
    %219 = arith.mulf %216, %218 : vector<1x256xf32>
    %220 = arith.addf %214, %219 : vector<1x256xf32>
    %221 = vector.extract_strided_slice %215 {offsets = [1, 0], sizes = [1, 256], strides = [1, 1]} : vector<2x256xf32> to vector<1x256xf32>
    %c51 = arith.constant 51 : index
    %222 = memref.load %arg7[%c51] : memref<98xf32, #tpu.memory_space<smem>>
    %223 = vector.broadcast %222 : f32 to vector<1x256xf32>
    %224 = arith.mulf %221, %223 : vector<1x256xf32>
    %225 = arith.addf %220, %224 : vector<1x256xf32>
    %c0_54 = arith.constant 0 : index
    %c95 = arith.constant 95 : index
    %226 = vector.load %arg9[%c0_54, %c95] : memref<2x512xf32, #tpu.memory_space<vmem>>, vector<2x256xf32>
    %227 = vector.extract_strided_slice %226 {offsets = [0, 0], sizes = [1, 256], strides = [1, 1]} : vector<2x256xf32> to vector<1x256xf32>
    %c9 = arith.constant 9 : index
    %228 = memref.load %arg7[%c9] : memref<98xf32, #tpu.memory_space<smem>>
    %229 = vector.broadcast %228 : f32 to vector<1x256xf32>
    %230 = arith.mulf %227, %229 : vector<1x256xf32>
    %231 = arith.addf %225, %230 : vector<1x256xf32>
    %232 = vector.extract_strided_slice %226 {offsets = [1, 0], sizes = [1, 256], strides = [1, 1]} : vector<2x256xf32> to vector<1x256xf32>
    %c58 = arith.constant 58 : index
    %233 = memref.load %arg7[%c58] : memref<98xf32, #tpu.memory_space<smem>>
    %234 = vector.broadcast %233 : f32 to vector<1x256xf32>
    %235 = arith.mulf %232, %234 : vector<1x256xf32>
    %236 = arith.addf %231, %235 : vector<1x256xf32>
    %c0_55 = arith.constant 0 : index
    %c111 = arith.constant 111 : index
    %237 = vector.load %arg9[%c0_55, %c111] : memref<2x512xf32, #tpu.memory_space<vmem>>, vector<2x256xf32>
    %238 = vector.extract_strided_slice %237 {offsets = [0, 0], sizes = [1, 256], strides = [1, 1]} : vector<2x256xf32> to vector<1x256xf32>
    %c16 = arith.constant 16 : index
    %239 = memref.load %arg7[%c16] : memref<98xf32, #tpu.memory_space<smem>>
    %240 = vector.broadcast %239 : f32 to vector<1x256xf32>
    %241 = arith.mulf %238, %240 : vector<1x256xf32>
    %242 = arith.addf %236, %241 : vector<1x256xf32>
    %243 = vector.extract_strided_slice %237 {offsets = [1, 0], sizes = [1, 256], strides = [1, 1]} : vector<2x256xf32> to vector<1x256xf32>
    %c65 = arith.constant 65 : index
    %244 = memref.load %arg7[%c65] : memref<98xf32, #tpu.memory_space<smem>>
    %245 = vector.broadcast %244 : f32 to vector<1x256xf32>
    %246 = arith.mulf %243, %245 : vector<1x256xf32>
    %247 = arith.addf %242, %246 : vector<1x256xf32>
    %c0_56 = arith.constant 0 : index
    %c127 = arith.constant 127 : index
    %248 = vector.load %arg9[%c0_56, %c127] : memref<2x512xf32, #tpu.memory_space<vmem>>, vector<2x256xf32>
    %249 = vector.extract_strided_slice %248 {offsets = [0, 0], sizes = [1, 256], strides = [1, 1]} : vector<2x256xf32> to vector<1x256xf32>
    %c23 = arith.constant 23 : index
    %250 = memref.load %arg7[%c23] : memref<98xf32, #tpu.memory_space<smem>>
    %251 = vector.broadcast %250 : f32 to vector<1x256xf32>
    %252 = arith.mulf %249, %251 : vector<1x256xf32>
    %253 = arith.addf %247, %252 : vector<1x256xf32>
    %254 = vector.extract_strided_slice %248 {offsets = [1, 0], sizes = [1, 256], strides = [1, 1]} : vector<2x256xf32> to vector<1x256xf32>
    %c72 = arith.constant 72 : index
    %255 = memref.load %arg7[%c72] : memref<98xf32, #tpu.memory_space<smem>>
    %256 = vector.broadcast %255 : f32 to vector<1x256xf32>
    %257 = arith.mulf %254, %256 : vector<1x256xf32>
    %258 = arith.addf %253, %257 : vector<1x256xf32>
    %c0_57 = arith.constant 0 : index
    %c143 = arith.constant 143 : index
    %259 = vector.load %arg9[%c0_57, %c143] : memref<2x512xf32, #tpu.memory_space<vmem>>, vector<2x256xf32>
    %260 = vector.extract_strided_slice %259 {offsets = [0, 0], sizes = [1, 256], strides = [1, 1]} : vector<2x256xf32> to vector<1x256xf32>
    %c30 = arith.constant 30 : index
    %261 = memref.load %arg7[%c30] : memref<98xf32, #tpu.memory_space<smem>>
    %262 = vector.broadcast %261 : f32 to vector<1x256xf32>
    %263 = arith.mulf %260, %262 : vector<1x256xf32>
    %264 = arith.addf %258, %263 : vector<1x256xf32>
    %265 = vector.extract_strided_slice %259 {offsets = [1, 0], sizes = [1, 256], strides = [1, 1]} : vector<2x256xf32> to vector<1x256xf32>
    %c79_58 = arith.constant 79 : index
    %266 = memref.load %arg7[%c79_58] : memref<98xf32, #tpu.memory_space<smem>>
    %267 = vector.broadcast %266 : f32 to vector<1x256xf32>
    %268 = arith.mulf %265, %267 : vector<1x256xf32>
    %269 = arith.addf %264, %268 : vector<1x256xf32>
    %c0_59 = arith.constant 0 : index
    %c159 = arith.constant 159 : index
    %270 = vector.load %arg9[%c0_59, %c159] : memref<2x512xf32, #tpu.memory_space<vmem>>, vector<2x256xf32>
    %271 = vector.extract_strided_slice %270 {offsets = [0, 0], sizes = [1, 256], strides = [1, 1]} : vector<2x256xf32> to vector<1x256xf32>
    %c37 = arith.constant 37 : index
    %272 = memref.load %arg7[%c37] : memref<98xf32, #tpu.memory_space<smem>>
    %273 = vector.broadcast %272 : f32 to vector<1x256xf32>
    %274 = arith.mulf %271, %273 : vector<1x256xf32>
    %275 = arith.addf %269, %274 : vector<1x256xf32>
    %276 = vector.extract_strided_slice %270 {offsets = [1, 0], sizes = [1, 256], strides = [1, 1]} : vector<2x256xf32> to vector<1x256xf32>
    %c86 = arith.constant 86 : index
    %277 = memref.load %arg7[%c86] : memref<98xf32, #tpu.memory_space<smem>>
    %278 = vector.broadcast %277 : f32 to vector<1x256xf32>
    %279 = arith.mulf %276, %278 : vector<1x256xf32>
    %280 = arith.addf %275, %279 : vector<1x256xf32>
    %c0_60 = arith.constant 0 : index
    %c175 = arith.constant 175 : index
    %281 = vector.load %arg9[%c0_60, %c175] : memref<2x512xf32, #tpu.memory_space<vmem>>, vector<2x256xf32>
    %282 = vector.extract_strided_slice %281 {offsets = [0, 0], sizes = [1, 256], strides = [1, 1]} : vector<2x256xf32> to vector<1x256xf32>
    %c44 = arith.constant 44 : index
    %283 = memref.load %arg7[%c44] : memref<98xf32, #tpu.memory_space<smem>>
    %284 = vector.broadcast %283 : f32 to vector<1x256xf32>
    %285 = arith.mulf %282, %284 : vector<1x256xf32>
    %286 = arith.addf %280, %285 : vector<1x256xf32>
    %287 = vector.extract_strided_slice %281 {offsets = [1, 0], sizes = [1, 256], strides = [1, 1]} : vector<2x256xf32> to vector<1x256xf32>
    %c93_61 = arith.constant 93 : index
    %288 = memref.load %arg7[%c93_61] : memref<98xf32, #tpu.memory_space<smem>>
    %289 = vector.broadcast %288 : f32 to vector<1x256xf32>
    %290 = arith.mulf %287, %289 : vector<1x256xf32>
    %291 = arith.addf %286, %290 : vector<1x256xf32>
    %c2_62 = arith.constant 2 : index
    %c0_63 = arith.constant 0 : index
    %292 = vector.load %arg6[%c2_62, %c0_63] : memref<7x256xf32, #tpu.memory_space<vmem>>, vector<1x256xf32>
    %293 = arith.mulf %291, %292 : vector<1x256xf32>
    %294 = arith.addf %213, %293 : vector<1x256xf32>
    %cst_64 = arith.constant 0.000000e+00 : f32
    %295 = vector.broadcast %cst_64 : f32 to vector<1x256xf32>
    %c0_65 = arith.constant 0 : index
    %c80 = arith.constant 80 : index
    %296 = vector.load %arg9[%c0_65, %c80] : memref<2x512xf32, #tpu.memory_space<vmem>>, vector<2x256xf32>
    %297 = vector.extract_strided_slice %296 {offsets = [0, 0], sizes = [1, 256], strides = [1, 1]} : vector<2x256xf32> to vector<1x256xf32>
    %c3 = arith.constant 3 : index
    %298 = memref.load %arg7[%c3] : memref<98xf32, #tpu.memory_space<smem>>
    %299 = vector.broadcast %298 : f32 to vector<1x256xf32>
    %300 = arith.mulf %297, %299 : vector<1x256xf32>
    %301 = arith.addf %295, %300 : vector<1x256xf32>
    %302 = vector.extract_strided_slice %296 {offsets = [1, 0], sizes = [1, 256], strides = [1, 1]} : vector<2x256xf32> to vector<1x256xf32>
    %c52 = arith.constant 52 : index
    %303 = memref.load %arg7[%c52] : memref<98xf32, #tpu.memory_space<smem>>
    %304 = vector.broadcast %303 : f32 to vector<1x256xf32>
    %305 = arith.mulf %302, %304 : vector<1x256xf32>
    %306 = arith.addf %301, %305 : vector<1x256xf32>
    %c0_66 = arith.constant 0 : index
    %c96 = arith.constant 96 : index
    %307 = vector.load %arg9[%c0_66, %c96] : memref<2x512xf32, #tpu.memory_space<vmem>>, vector<2x256xf32>
    %308 = vector.extract_strided_slice %307 {offsets = [0, 0], sizes = [1, 256], strides = [1, 1]} : vector<2x256xf32> to vector<1x256xf32>
    %c10 = arith.constant 10 : index
    %309 = memref.load %arg7[%c10] : memref<98xf32, #tpu.memory_space<smem>>
    %310 = vector.broadcast %309 : f32 to vector<1x256xf32>
    %311 = arith.mulf %308, %310 : vector<1x256xf32>
    %312 = arith.addf %306, %311 : vector<1x256xf32>
    %313 = vector.extract_strided_slice %307 {offsets = [1, 0], sizes = [1, 256], strides = [1, 1]} : vector<2x256xf32> to vector<1x256xf32>
    %c59 = arith.constant 59 : index
    %314 = memref.load %arg7[%c59] : memref<98xf32, #tpu.memory_space<smem>>
    %315 = vector.broadcast %314 : f32 to vector<1x256xf32>
    %316 = arith.mulf %313, %315 : vector<1x256xf32>
    %317 = arith.addf %312, %316 : vector<1x256xf32>
    %c0_67 = arith.constant 0 : index
    %c112 = arith.constant 112 : index
    %318 = vector.load %arg9[%c0_67, %c112] : memref<2x512xf32, #tpu.memory_space<vmem>>, vector<2x256xf32>
    %319 = vector.extract_strided_slice %318 {offsets = [0, 0], sizes = [1, 256], strides = [1, 1]} : vector<2x256xf32> to vector<1x256xf32>
    %c17 = arith.constant 17 : index
    %320 = memref.load %arg7[%c17] : memref<98xf32, #tpu.memory_space<smem>>
    %321 = vector.broadcast %320 : f32 to vector<1x256xf32>
    %322 = arith.mulf %319, %321 : vector<1x256xf32>
    %323 = arith.addf %317, %322 : vector<1x256xf32>
    %324 = vector.extract_strided_slice %318 {offsets = [1, 0], sizes = [1, 256], strides = [1, 1]} : vector<2x256xf32> to vector<1x256xf32>
    %c66 = arith.constant 66 : index
    %325 = memref.load %arg7[%c66] : memref<98xf32, #tpu.memory_space<smem>>
    %326 = vector.broadcast %325 : f32 to vector<1x256xf32>
    %327 = arith.mulf %324, %326 : vector<1x256xf32>
    %328 = arith.addf %323, %327 : vector<1x256xf32>
    %c0_68 = arith.constant 0 : index
    %c128_69 = arith.constant 128 : index
    %329 = vector.load %arg9[%c0_68, %c128_69] : memref<2x512xf32, #tpu.memory_space<vmem>>, vector<2x256xf32>
    %330 = vector.extract_strided_slice %329 {offsets = [0, 0], sizes = [1, 256], strides = [1, 1]} : vector<2x256xf32> to vector<1x256xf32>
    %c24 = arith.constant 24 : index
    %331 = memref.load %arg7[%c24] : memref<98xf32, #tpu.memory_space<smem>>
    %332 = vector.broadcast %331 : f32 to vector<1x256xf32>
    %333 = arith.mulf %330, %332 : vector<1x256xf32>
    %334 = arith.addf %328, %333 : vector<1x256xf32>
    %335 = vector.extract_strided_slice %329 {offsets = [1, 0], sizes = [1, 256], strides = [1, 1]} : vector<2x256xf32> to vector<1x256xf32>
    %c73 = arith.constant 73 : index
    %336 = memref.load %arg7[%c73] : memref<98xf32, #tpu.memory_space<smem>>
    %337 = vector.broadcast %336 : f32 to vector<1x256xf32>
    %338 = arith.mulf %335, %337 : vector<1x256xf32>
    %339 = arith.addf %334, %338 : vector<1x256xf32>
    %c0_70 = arith.constant 0 : index
    %c144 = arith.constant 144 : index
    %340 = vector.load %arg9[%c0_70, %c144] : memref<2x512xf32, #tpu.memory_space<vmem>>, vector<2x256xf32>
    %341 = vector.extract_strided_slice %340 {offsets = [0, 0], sizes = [1, 256], strides = [1, 1]} : vector<2x256xf32> to vector<1x256xf32>
    %c31 = arith.constant 31 : index
    %342 = memref.load %arg7[%c31] : memref<98xf32, #tpu.memory_space<smem>>
    %343 = vector.broadcast %342 : f32 to vector<1x256xf32>
    %344 = arith.mulf %341, %343 : vector<1x256xf32>
    %345 = arith.addf %339, %344 : vector<1x256xf32>
    %346 = vector.extract_strided_slice %340 {offsets = [1, 0], sizes = [1, 256], strides = [1, 1]} : vector<2x256xf32> to vector<1x256xf32>
    %c80_71 = arith.constant 80 : index
    %347 = memref.load %arg7[%c80_71] : memref<98xf32, #tpu.memory_space<smem>>
    %348 = vector.broadcast %347 : f32 to vector<1x256xf32>
    %349 = arith.mulf %346, %348 : vector<1x256xf32>
    %350 = arith.addf %345, %349 : vector<1x256xf32>
    %c0_72 = arith.constant 0 : index
    %c160 = arith.constant 160 : index
    %351 = vector.load %arg9[%c0_72, %c160] : memref<2x512xf32, #tpu.memory_space<vmem>>, vector<2x256xf32>
    %352 = vector.extract_strided_slice %351 {offsets = [0, 0], sizes = [1, 256], strides = [1, 1]} : vector<2x256xf32> to vector<1x256xf32>
    %c38 = arith.constant 38 : index
    %353 = memref.load %arg7[%c38] : memref<98xf32, #tpu.memory_space<smem>>
    %354 = vector.broadcast %353 : f32 to vector<1x256xf32>
    %355 = arith.mulf %352, %354 : vector<1x256xf32>
    %356 = arith.addf %350, %355 : vector<1x256xf32>
    %357 = vector.extract_strided_slice %351 {offsets = [1, 0], sizes = [1, 256], strides = [1, 1]} : vector<2x256xf32> to vector<1x256xf32>
    %c87 = arith.constant 87 : index
    %358 = memref.load %arg7[%c87] : memref<98xf32, #tpu.memory_space<smem>>
    %359 = vector.broadcast %358 : f32 to vector<1x256xf32>
    %360 = arith.mulf %357, %359 : vector<1x256xf32>
    %361 = arith.addf %356, %360 : vector<1x256xf32>
    %c0_73 = arith.constant 0 : index
    %c176 = arith.constant 176 : index
    %362 = vector.load %arg9[%c0_73, %c176] : memref<2x512xf32, #tpu.memory_space<vmem>>, vector<2x256xf32>
    %363 = vector.extract_strided_slice %362 {offsets = [0, 0], sizes = [1, 256], strides = [1, 1]} : vector<2x256xf32> to vector<1x256xf32>
    %c45 = arith.constant 45 : index
    %364 = memref.load %arg7[%c45] : memref<98xf32, #tpu.memory_space<smem>>
    %365 = vector.broadcast %364 : f32 to vector<1x256xf32>
    %366 = arith.mulf %363, %365 : vector<1x256xf32>
    %367 = arith.addf %361, %366 : vector<1x256xf32>
    %368 = vector.extract_strided_slice %362 {offsets = [1, 0], sizes = [1, 256], strides = [1, 1]} : vector<2x256xf32> to vector<1x256xf32>
    %c94_74 = arith.constant 94 : index
    %369 = memref.load %arg7[%c94_74] : memref<98xf32, #tpu.memory_space<smem>>
    %370 = vector.broadcast %369 : f32 to vector<1x256xf32>
    %371 = arith.mulf %368, %370 : vector<1x256xf32>
    %372 = arith.addf %367, %371 : vector<1x256xf32>
    %c3_75 = arith.constant 3 : index
    %c0_76 = arith.constant 0 : index
    %373 = vector.load %arg6[%c3_75, %c0_76] : memref<7x256xf32, #tpu.memory_space<vmem>>, vector<1x256xf32>
    %374 = arith.mulf %372, %373 : vector<1x256xf32>
    %375 = arith.addf %294, %374 : vector<1x256xf32>
    %cst_77 = arith.constant 0.000000e+00 : f32
    %376 = vector.broadcast %cst_77 : f32 to vector<1x256xf32>
    %c0_78 = arith.constant 0 : index
    %c81 = arith.constant 81 : index
    %377 = vector.load %arg9[%c0_78, %c81] : memref<2x512xf32, #tpu.memory_space<vmem>>, vector<2x256xf32>
    %378 = vector.extract_strided_slice %377 {offsets = [0, 0], sizes = [1, 256], strides = [1, 1]} : vector<2x256xf32> to vector<1x256xf32>
    %c4 = arith.constant 4 : index
    %379 = memref.load %arg7[%c4] : memref<98xf32, #tpu.memory_space<smem>>
    %380 = vector.broadcast %379 : f32 to vector<1x256xf32>
    %381 = arith.mulf %378, %380 : vector<1x256xf32>
    %382 = arith.addf %376, %381 : vector<1x256xf32>
    %383 = vector.extract_strided_slice %377 {offsets = [1, 0], sizes = [1, 256], strides = [1, 1]} : vector<2x256xf32> to vector<1x256xf32>
    %c53 = arith.constant 53 : index
    %384 = memref.load %arg7[%c53] : memref<98xf32, #tpu.memory_space<smem>>
    %385 = vector.broadcast %384 : f32 to vector<1x256xf32>
    %386 = arith.mulf %383, %385 : vector<1x256xf32>
    %387 = arith.addf %382, %386 : vector<1x256xf32>
    %c0_79 = arith.constant 0 : index
    %c97 = arith.constant 97 : index
    %388 = vector.load %arg9[%c0_79, %c97] : memref<2x512xf32, #tpu.memory_space<vmem>>, vector<2x256xf32>
    %389 = vector.extract_strided_slice %388 {offsets = [0, 0], sizes = [1, 256], strides = [1, 1]} : vector<2x256xf32> to vector<1x256xf32>
    %c11 = arith.constant 11 : index
    %390 = memref.load %arg7[%c11] : memref<98xf32, #tpu.memory_space<smem>>
    %391 = vector.broadcast %390 : f32 to vector<1x256xf32>
    %392 = arith.mulf %389, %391 : vector<1x256xf32>
    %393 = arith.addf %387, %392 : vector<1x256xf32>
    %394 = vector.extract_strided_slice %388 {offsets = [1, 0], sizes = [1, 256], strides = [1, 1]} : vector<2x256xf32> to vector<1x256xf32>
    %c60 = arith.constant 60 : index
    %395 = memref.load %arg7[%c60] : memref<98xf32, #tpu.memory_space<smem>>
    %396 = vector.broadcast %395 : f32 to vector<1x256xf32>
    %397 = arith.mulf %394, %396 : vector<1x256xf32>
    %398 = arith.addf %393, %397 : vector<1x256xf32>
    %c0_80 = arith.constant 0 : index
    %c113 = arith.constant 113 : index
    %399 = vector.load %arg9[%c0_80, %c113] : memref<2x512xf32, #tpu.memory_space<vmem>>, vector<2x256xf32>
    %400 = vector.extract_strided_slice %399 {offsets = [0, 0], sizes = [1, 256], strides = [1, 1]} : vector<2x256xf32> to vector<1x256xf32>
    %c18 = arith.constant 18 : index
    %401 = memref.load %arg7[%c18] : memref<98xf32, #tpu.memory_space<smem>>
    %402 = vector.broadcast %401 : f32 to vector<1x256xf32>
    %403 = arith.mulf %400, %402 : vector<1x256xf32>
    %404 = arith.addf %398, %403 : vector<1x256xf32>
    %405 = vector.extract_strided_slice %399 {offsets = [1, 0], sizes = [1, 256], strides = [1, 1]} : vector<2x256xf32> to vector<1x256xf32>
    %c67 = arith.constant 67 : index
    %406 = memref.load %arg7[%c67] : memref<98xf32, #tpu.memory_space<smem>>
    %407 = vector.broadcast %406 : f32 to vector<1x256xf32>
    %408 = arith.mulf %405, %407 : vector<1x256xf32>
    %409 = arith.addf %404, %408 : vector<1x256xf32>
    %c0_81 = arith.constant 0 : index
    %c129 = arith.constant 129 : index
    %410 = vector.load %arg9[%c0_81, %c129] : memref<2x512xf32, #tpu.memory_space<vmem>>, vector<2x256xf32>
    %411 = vector.extract_strided_slice %410 {offsets = [0, 0], sizes = [1, 256], strides = [1, 1]} : vector<2x256xf32> to vector<1x256xf32>
    %c25 = arith.constant 25 : index
    %412 = memref.load %arg7[%c25] : memref<98xf32, #tpu.memory_space<smem>>
    %413 = vector.broadcast %412 : f32 to vector<1x256xf32>
    %414 = arith.mulf %411, %413 : vector<1x256xf32>
    %415 = arith.addf %409, %414 : vector<1x256xf32>
    %416 = vector.extract_strided_slice %410 {offsets = [1, 0], sizes = [1, 256], strides = [1, 1]} : vector<2x256xf32> to vector<1x256xf32>
    %c74 = arith.constant 74 : index
    %417 = memref.load %arg7[%c74] : memref<98xf32, #tpu.memory_space<smem>>
    %418 = vector.broadcast %417 : f32 to vector<1x256xf32>
    %419 = arith.mulf %416, %418 : vector<1x256xf32>
    %420 = arith.addf %415, %419 : vector<1x256xf32>
    %c0_82 = arith.constant 0 : index
    %c145 = arith.constant 145 : index
    %421 = vector.load %arg9[%c0_82, %c145] : memref<2x512xf32, #tpu.memory_space<vmem>>, vector<2x256xf32>
    %422 = vector.extract_strided_slice %421 {offsets = [0, 0], sizes = [1, 256], strides = [1, 1]} : vector<2x256xf32> to vector<1x256xf32>
    %c32 = arith.constant 32 : index
    %423 = memref.load %arg7[%c32] : memref<98xf32, #tpu.memory_space<smem>>
    %424 = vector.broadcast %423 : f32 to vector<1x256xf32>
    %425 = arith.mulf %422, %424 : vector<1x256xf32>
    %426 = arith.addf %420, %425 : vector<1x256xf32>
    %427 = vector.extract_strided_slice %421 {offsets = [1, 0], sizes = [1, 256], strides = [1, 1]} : vector<2x256xf32> to vector<1x256xf32>
    %c81_83 = arith.constant 81 : index
    %428 = memref.load %arg7[%c81_83] : memref<98xf32, #tpu.memory_space<smem>>
    %429 = vector.broadcast %428 : f32 to vector<1x256xf32>
    %430 = arith.mulf %427, %429 : vector<1x256xf32>
    %431 = arith.addf %426, %430 : vector<1x256xf32>
    %c0_84 = arith.constant 0 : index
    %c161 = arith.constant 161 : index
    %432 = vector.load %arg9[%c0_84, %c161] : memref<2x512xf32, #tpu.memory_space<vmem>>, vector<2x256xf32>
    %433 = vector.extract_strided_slice %432 {offsets = [0, 0], sizes = [1, 256], strides = [1, 1]} : vector<2x256xf32> to vector<1x256xf32>
    %c39 = arith.constant 39 : index
    %434 = memref.load %arg7[%c39] : memref<98xf32, #tpu.memory_space<smem>>
    %435 = vector.broadcast %434 : f32 to vector<1x256xf32>
    %436 = arith.mulf %433, %435 : vector<1x256xf32>
    %437 = arith.addf %431, %436 : vector<1x256xf32>
    %438 = vector.extract_strided_slice %432 {offsets = [1, 0], sizes = [1, 256], strides = [1, 1]} : vector<2x256xf32> to vector<1x256xf32>
    %c88 = arith.constant 88 : index
    %439 = memref.load %arg7[%c88] : memref<98xf32, #tpu.memory_space<smem>>
    %440 = vector.broadcast %439 : f32 to vector<1x256xf32>
    %441 = arith.mulf %438, %440 : vector<1x256xf32>
    %442 = arith.addf %437, %441 : vector<1x256xf32>
    %c0_85 = arith.constant 0 : index
    %c177 = arith.constant 177 : index
    %443 = vector.load %arg9[%c0_85, %c177] : memref<2x512xf32, #tpu.memory_space<vmem>>, vector<2x256xf32>
    %444 = vector.extract_strided_slice %443 {offsets = [0, 0], sizes = [1, 256], strides = [1, 1]} : vector<2x256xf32> to vector<1x256xf32>
    %c46 = arith.constant 46 : index
    %445 = memref.load %arg7[%c46] : memref<98xf32, #tpu.memory_space<smem>>
    %446 = vector.broadcast %445 : f32 to vector<1x256xf32>
    %447 = arith.mulf %444, %446 : vector<1x256xf32>
    %448 = arith.addf %442, %447 : vector<1x256xf32>
    %449 = vector.extract_strided_slice %443 {offsets = [1, 0], sizes = [1, 256], strides = [1, 1]} : vector<2x256xf32> to vector<1x256xf32>
    %c95_86 = arith.constant 95 : index
    %450 = memref.load %arg7[%c95_86] : memref<98xf32, #tpu.memory_space<smem>>
    %451 = vector.broadcast %450 : f32 to vector<1x256xf32>
    %452 = arith.mulf %449, %451 : vector<1x256xf32>
    %453 = arith.addf %448, %452 : vector<1x256xf32>
    %c4_87 = arith.constant 4 : index
    %c0_88 = arith.constant 0 : index
    %454 = vector.load %arg6[%c4_87, %c0_88] : memref<7x256xf32, #tpu.memory_space<vmem>>, vector<1x256xf32>
    %455 = arith.mulf %453, %454 : vector<1x256xf32>
    %456 = arith.addf %375, %455 : vector<1x256xf32>
    %cst_89 = arith.constant 0.000000e+00 : f32
    %457 = vector.broadcast %cst_89 : f32 to vector<1x256xf32>
    %c0_90 = arith.constant 0 : index
    %c82 = arith.constant 82 : index
    %458 = vector.load %arg9[%c0_90, %c82] : memref<2x512xf32, #tpu.memory_space<vmem>>, vector<2x256xf32>
    %459 = vector.extract_strided_slice %458 {offsets = [0, 0], sizes = [1, 256], strides = [1, 1]} : vector<2x256xf32> to vector<1x256xf32>
    %c5 = arith.constant 5 : index
    %460 = memref.load %arg7[%c5] : memref<98xf32, #tpu.memory_space<smem>>
    %461 = vector.broadcast %460 : f32 to vector<1x256xf32>
    %462 = arith.mulf %459, %461 : vector<1x256xf32>
    %463 = arith.addf %457, %462 : vector<1x256xf32>
    %464 = vector.extract_strided_slice %458 {offsets = [1, 0], sizes = [1, 256], strides = [1, 1]} : vector<2x256xf32> to vector<1x256xf32>
    %c54 = arith.constant 54 : index
    %465 = memref.load %arg7[%c54] : memref<98xf32, #tpu.memory_space<smem>>
    %466 = vector.broadcast %465 : f32 to vector<1x256xf32>
    %467 = arith.mulf %464, %466 : vector<1x256xf32>
    %468 = arith.addf %463, %467 : vector<1x256xf32>
    %c0_91 = arith.constant 0 : index
    %c98 = arith.constant 98 : index
    %469 = vector.load %arg9[%c0_91, %c98] : memref<2x512xf32, #tpu.memory_space<vmem>>, vector<2x256xf32>
    %470 = vector.extract_strided_slice %469 {offsets = [0, 0], sizes = [1, 256], strides = [1, 1]} : vector<2x256xf32> to vector<1x256xf32>
    %c12 = arith.constant 12 : index
    %471 = memref.load %arg7[%c12] : memref<98xf32, #tpu.memory_space<smem>>
    %472 = vector.broadcast %471 : f32 to vector<1x256xf32>
    %473 = arith.mulf %470, %472 : vector<1x256xf32>
    %474 = arith.addf %468, %473 : vector<1x256xf32>
    %475 = vector.extract_strided_slice %469 {offsets = [1, 0], sizes = [1, 256], strides = [1, 1]} : vector<2x256xf32> to vector<1x256xf32>
    %c61 = arith.constant 61 : index
    %476 = memref.load %arg7[%c61] : memref<98xf32, #tpu.memory_space<smem>>
    %477 = vector.broadcast %476 : f32 to vector<1x256xf32>
    %478 = arith.mulf %475, %477 : vector<1x256xf32>
    %479 = arith.addf %474, %478 : vector<1x256xf32>
    %c0_92 = arith.constant 0 : index
    %c114 = arith.constant 114 : index
    %480 = vector.load %arg9[%c0_92, %c114] : memref<2x512xf32, #tpu.memory_space<vmem>>, vector<2x256xf32>
    %481 = vector.extract_strided_slice %480 {offsets = [0, 0], sizes = [1, 256], strides = [1, 1]} : vector<2x256xf32> to vector<1x256xf32>
    %c19 = arith.constant 19 : index
    %482 = memref.load %arg7[%c19] : memref<98xf32, #tpu.memory_space<smem>>
    %483 = vector.broadcast %482 : f32 to vector<1x256xf32>
    %484 = arith.mulf %481, %483 : vector<1x256xf32>
    %485 = arith.addf %479, %484 : vector<1x256xf32>
    %486 = vector.extract_strided_slice %480 {offsets = [1, 0], sizes = [1, 256], strides = [1, 1]} : vector<2x256xf32> to vector<1x256xf32>
    %c68 = arith.constant 68 : index
    %487 = memref.load %arg7[%c68] : memref<98xf32, #tpu.memory_space<smem>>
    %488 = vector.broadcast %487 : f32 to vector<1x256xf32>
    %489 = arith.mulf %486, %488 : vector<1x256xf32>
    %490 = arith.addf %485, %489 : vector<1x256xf32>
    %c0_93 = arith.constant 0 : index
    %c130 = arith.constant 130 : index
    %491 = vector.load %arg9[%c0_93, %c130] : memref<2x512xf32, #tpu.memory_space<vmem>>, vector<2x256xf32>
    %492 = vector.extract_strided_slice %491 {offsets = [0, 0], sizes = [1, 256], strides = [1, 1]} : vector<2x256xf32> to vector<1x256xf32>
    %c26 = arith.constant 26 : index
    %493 = memref.load %arg7[%c26] : memref<98xf32, #tpu.memory_space<smem>>
    %494 = vector.broadcast %493 : f32 to vector<1x256xf32>
    %495 = arith.mulf %492, %494 : vector<1x256xf32>
    %496 = arith.addf %490, %495 : vector<1x256xf32>
    %497 = vector.extract_strided_slice %491 {offsets = [1, 0], sizes = [1, 256], strides = [1, 1]} : vector<2x256xf32> to vector<1x256xf32>
    %c75 = arith.constant 75 : index
    %498 = memref.load %arg7[%c75] : memref<98xf32, #tpu.memory_space<smem>>
    %499 = vector.broadcast %498 : f32 to vector<1x256xf32>
    %500 = arith.mulf %497, %499 : vector<1x256xf32>
    %501 = arith.addf %496, %500 : vector<1x256xf32>
    %c0_94 = arith.constant 0 : index
    %c146 = arith.constant 146 : index
    %502 = vector.load %arg9[%c0_94, %c146] : memref<2x512xf32, #tpu.memory_space<vmem>>, vector<2x256xf32>
    %503 = vector.extract_strided_slice %502 {offsets = [0, 0], sizes = [1, 256], strides = [1, 1]} : vector<2x256xf32> to vector<1x256xf32>
    %c33 = arith.constant 33 : index
    %504 = memref.load %arg7[%c33] : memref<98xf32, #tpu.memory_space<smem>>
    %505 = vector.broadcast %504 : f32 to vector<1x256xf32>
    %506 = arith.mulf %503, %505 : vector<1x256xf32>
    %507 = arith.addf %501, %506 : vector<1x256xf32>
    %508 = vector.extract_strided_slice %502 {offsets = [1, 0], sizes = [1, 256], strides = [1, 1]} : vector<2x256xf32> to vector<1x256xf32>
    %c82_95 = arith.constant 82 : index
    %509 = memref.load %arg7[%c82_95] : memref<98xf32, #tpu.memory_space<smem>>
    %510 = vector.broadcast %509 : f32 to vector<1x256xf32>
    %511 = arith.mulf %508, %510 : vector<1x256xf32>
    %512 = arith.addf %507, %511 : vector<1x256xf32>
    %c0_96 = arith.constant 0 : index
    %c162 = arith.constant 162 : index
    %513 = vector.load %arg9[%c0_96, %c162] : memref<2x512xf32, #tpu.memory_space<vmem>>, vector<2x256xf32>
    %514 = vector.extract_strided_slice %513 {offsets = [0, 0], sizes = [1, 256], strides = [1, 1]} : vector<2x256xf32> to vector<1x256xf32>
    %c40 = arith.constant 40 : index
    %515 = memref.load %arg7[%c40] : memref<98xf32, #tpu.memory_space<smem>>
    %516 = vector.broadcast %515 : f32 to vector<1x256xf32>
    %517 = arith.mulf %514, %516 : vector<1x256xf32>
    %518 = arith.addf %512, %517 : vector<1x256xf32>
    %519 = vector.extract_strided_slice %513 {offsets = [1, 0], sizes = [1, 256], strides = [1, 1]} : vector<2x256xf32> to vector<1x256xf32>
    %c89 = arith.constant 89 : index
    %520 = memref.load %arg7[%c89] : memref<98xf32, #tpu.memory_space<smem>>
    %521 = vector.broadcast %520 : f32 to vector<1x256xf32>
    %522 = arith.mulf %519, %521 : vector<1x256xf32>
    %523 = arith.addf %518, %522 : vector<1x256xf32>
    %c0_97 = arith.constant 0 : index
    %c178 = arith.constant 178 : index
    %524 = vector.load %arg9[%c0_97, %c178] : memref<2x512xf32, #tpu.memory_space<vmem>>, vector<2x256xf32>
    %525 = vector.extract_strided_slice %524 {offsets = [0, 0], sizes = [1, 256], strides = [1, 1]} : vector<2x256xf32> to vector<1x256xf32>
    %c47 = arith.constant 47 : index
    %526 = memref.load %arg7[%c47] : memref<98xf32, #tpu.memory_space<smem>>
    %527 = vector.broadcast %526 : f32 to vector<1x256xf32>
    %528 = arith.mulf %525, %527 : vector<1x256xf32>
    %529 = arith.addf %523, %528 : vector<1x256xf32>
    %530 = vector.extract_strided_slice %524 {offsets = [1, 0], sizes = [1, 256], strides = [1, 1]} : vector<2x256xf32> to vector<1x256xf32>
    %c96_98 = arith.constant 96 : index
    %531 = memref.load %arg7[%c96_98] : memref<98xf32, #tpu.memory_space<smem>>
    %532 = vector.broadcast %531 : f32 to vector<1x256xf32>
    %533 = arith.mulf %530, %532 : vector<1x256xf32>
    %534 = arith.addf %529, %533 : vector<1x256xf32>
    %c5_99 = arith.constant 5 : index
    %c0_100 = arith.constant 0 : index
    %535 = vector.load %arg6[%c5_99, %c0_100] : memref<7x256xf32, #tpu.memory_space<vmem>>, vector<1x256xf32>
    %536 = arith.mulf %534, %535 : vector<1x256xf32>
    %537 = arith.addf %456, %536 : vector<1x256xf32>
    %cst_101 = arith.constant 0.000000e+00 : f32
    %538 = vector.broadcast %cst_101 : f32 to vector<1x256xf32>
    %c0_102 = arith.constant 0 : index
    %c83 = arith.constant 83 : index
    %539 = vector.load %arg9[%c0_102, %c83] : memref<2x512xf32, #tpu.memory_space<vmem>>, vector<2x256xf32>
    %540 = vector.extract_strided_slice %539 {offsets = [0, 0], sizes = [1, 256], strides = [1, 1]} : vector<2x256xf32> to vector<1x256xf32>
    %c6 = arith.constant 6 : index
    %541 = memref.load %arg7[%c6] : memref<98xf32, #tpu.memory_space<smem>>
    %542 = vector.broadcast %541 : f32 to vector<1x256xf32>
    %543 = arith.mulf %540, %542 : vector<1x256xf32>
    %544 = arith.addf %538, %543 : vector<1x256xf32>
    %545 = vector.extract_strided_slice %539 {offsets = [1, 0], sizes = [1, 256], strides = [1, 1]} : vector<2x256xf32> to vector<1x256xf32>
    %c55 = arith.constant 55 : index
    %546 = memref.load %arg7[%c55] : memref<98xf32, #tpu.memory_space<smem>>
    %547 = vector.broadcast %546 : f32 to vector<1x256xf32>
    %548 = arith.mulf %545, %547 : vector<1x256xf32>
    %549 = arith.addf %544, %548 : vector<1x256xf32>
    %c0_103 = arith.constant 0 : index
    %c99 = arith.constant 99 : index
    %550 = vector.load %arg9[%c0_103, %c99] : memref<2x512xf32, #tpu.memory_space<vmem>>, vector<2x256xf32>
    %551 = vector.extract_strided_slice %550 {offsets = [0, 0], sizes = [1, 256], strides = [1, 1]} : vector<2x256xf32> to vector<1x256xf32>
    %c13 = arith.constant 13 : index
    %552 = memref.load %arg7[%c13] : memref<98xf32, #tpu.memory_space<smem>>
    %553 = vector.broadcast %552 : f32 to vector<1x256xf32>
    %554 = arith.mulf %551, %553 : vector<1x256xf32>
    %555 = arith.addf %549, %554 : vector<1x256xf32>
    %556 = vector.extract_strided_slice %550 {offsets = [1, 0], sizes = [1, 256], strides = [1, 1]} : vector<2x256xf32> to vector<1x256xf32>
    %c62 = arith.constant 62 : index
    %557 = memref.load %arg7[%c62] : memref<98xf32, #tpu.memory_space<smem>>
    %558 = vector.broadcast %557 : f32 to vector<1x256xf32>
    %559 = arith.mulf %556, %558 : vector<1x256xf32>
    %560 = arith.addf %555, %559 : vector<1x256xf32>
    %c0_104 = arith.constant 0 : index
    %c115 = arith.constant 115 : index
    %561 = vector.load %arg9[%c0_104, %c115] : memref<2x512xf32, #tpu.memory_space<vmem>>, vector<2x256xf32>
    %562 = vector.extract_strided_slice %561 {offsets = [0, 0], sizes = [1, 256], strides = [1, 1]} : vector<2x256xf32> to vector<1x256xf32>
    %c20 = arith.constant 20 : index
    %563 = memref.load %arg7[%c20] : memref<98xf32, #tpu.memory_space<smem>>
    %564 = vector.broadcast %563 : f32 to vector<1x256xf32>
    %565 = arith.mulf %562, %564 : vector<1x256xf32>
    %566 = arith.addf %560, %565 : vector<1x256xf32>
    %567 = vector.extract_strided_slice %561 {offsets = [1, 0], sizes = [1, 256], strides = [1, 1]} : vector<2x256xf32> to vector<1x256xf32>
    %c69 = arith.constant 69 : index
    %568 = memref.load %arg7[%c69] : memref<98xf32, #tpu.memory_space<smem>>
    %569 = vector.broadcast %568 : f32 to vector<1x256xf32>
    %570 = arith.mulf %567, %569 : vector<1x256xf32>
    %571 = arith.addf %566, %570 : vector<1x256xf32>
    %c0_105 = arith.constant 0 : index
    %c131 = arith.constant 131 : index
    %572 = vector.load %arg9[%c0_105, %c131] : memref<2x512xf32, #tpu.memory_space<vmem>>, vector<2x256xf32>
    %573 = vector.extract_strided_slice %572 {offsets = [0, 0], sizes = [1, 256], strides = [1, 1]} : vector<2x256xf32> to vector<1x256xf32>
    %c27 = arith.constant 27 : index
    %574 = memref.load %arg7[%c27] : memref<98xf32, #tpu.memory_space<smem>>
    %575 = vector.broadcast %574 : f32 to vector<1x256xf32>
    %576 = arith.mulf %573, %575 : vector<1x256xf32>
    %577 = arith.addf %571, %576 : vector<1x256xf32>
    %578 = vector.extract_strided_slice %572 {offsets = [1, 0], sizes = [1, 256], strides = [1, 1]} : vector<2x256xf32> to vector<1x256xf32>
    %c76 = arith.constant 76 : index
    %579 = memref.load %arg7[%c76] : memref<98xf32, #tpu.memory_space<smem>>
    %580 = vector.broadcast %579 : f32 to vector<1x256xf32>
    %581 = arith.mulf %578, %580 : vector<1x256xf32>
    %582 = arith.addf %577, %581 : vector<1x256xf32>
    %c0_106 = arith.constant 0 : index
    %c147 = arith.constant 147 : index
    %583 = vector.load %arg9[%c0_106, %c147] : memref<2x512xf32, #tpu.memory_space<vmem>>, vector<2x256xf32>
    %584 = vector.extract_strided_slice %583 {offsets = [0, 0], sizes = [1, 256], strides = [1, 1]} : vector<2x256xf32> to vector<1x256xf32>
    %c34 = arith.constant 34 : index
    %585 = memref.load %arg7[%c34] : memref<98xf32, #tpu.memory_space<smem>>
    %586 = vector.broadcast %585 : f32 to vector<1x256xf32>
    %587 = arith.mulf %584, %586 : vector<1x256xf32>
    %588 = arith.addf %582, %587 : vector<1x256xf32>
    %589 = vector.extract_strided_slice %583 {offsets = [1, 0], sizes = [1, 256], strides = [1, 1]} : vector<2x256xf32> to vector<1x256xf32>
    %c83_107 = arith.constant 83 : index
    %590 = memref.load %arg7[%c83_107] : memref<98xf32, #tpu.memory_space<smem>>
    %591 = vector.broadcast %590 : f32 to vector<1x256xf32>
    %592 = arith.mulf %589, %591 : vector<1x256xf32>
    %593 = arith.addf %588, %592 : vector<1x256xf32>
    %c0_108 = arith.constant 0 : index
    %c163 = arith.constant 163 : index
    %594 = vector.load %arg9[%c0_108, %c163] : memref<2x512xf32, #tpu.memory_space<vmem>>, vector<2x256xf32>
    %595 = vector.extract_strided_slice %594 {offsets = [0, 0], sizes = [1, 256], strides = [1, 1]} : vector<2x256xf32> to vector<1x256xf32>
    %c41 = arith.constant 41 : index
    %596 = memref.load %arg7[%c41] : memref<98xf32, #tpu.memory_space<smem>>
    %597 = vector.broadcast %596 : f32 to vector<1x256xf32>
    %598 = arith.mulf %595, %597 : vector<1x256xf32>
    %599 = arith.addf %593, %598 : vector<1x256xf32>
    %600 = vector.extract_strided_slice %594 {offsets = [1, 0], sizes = [1, 256], strides = [1, 1]} : vector<2x256xf32> to vector<1x256xf32>
    %c90 = arith.constant 90 : index
    %601 = memref.load %arg7[%c90] : memref<98xf32, #tpu.memory_space<smem>>
    %602 = vector.broadcast %601 : f32 to vector<1x256xf32>
    %603 = arith.mulf %600, %602 : vector<1x256xf32>
    %604 = arith.addf %599, %603 : vector<1x256xf32>
    %c0_109 = arith.constant 0 : index
    %c179 = arith.constant 179 : index
    %605 = vector.load %arg9[%c0_109, %c179] : memref<2x512xf32, #tpu.memory_space<vmem>>, vector<2x256xf32>
    %606 = vector.extract_strided_slice %605 {offsets = [0, 0], sizes = [1, 256], strides = [1, 1]} : vector<2x256xf32> to vector<1x256xf32>
    %c48 = arith.constant 48 : index
    %607 = memref.load %arg7[%c48] : memref<98xf32, #tpu.memory_space<smem>>
    %608 = vector.broadcast %607 : f32 to vector<1x256xf32>
    %609 = arith.mulf %606, %608 : vector<1x256xf32>
    %610 = arith.addf %604, %609 : vector<1x256xf32>
    %611 = vector.extract_strided_slice %605 {offsets = [1, 0], sizes = [1, 256], strides = [1, 1]} : vector<2x256xf32> to vector<1x256xf32>
    %c97_110 = arith.constant 97 : index
    %612 = memref.load %arg7[%c97_110] : memref<98xf32, #tpu.memory_space<smem>>
    %613 = vector.broadcast %612 : f32 to vector<1x256xf32>
    %614 = arith.mulf %611, %613 : vector<1x256xf32>
    %615 = arith.addf %610, %614 : vector<1x256xf32>
    %c6_111 = arith.constant 6 : index
    %c0_112 = arith.constant 0 : index
    %616 = vector.load %arg6[%c6_111, %c0_112] : memref<7x256xf32, #tpu.memory_space<vmem>>, vector<1x256xf32>
    %617 = arith.mulf %615, %616 : vector<1x256xf32>
    %618 = arith.addf %537, %617 : vector<1x256xf32>
    %619 = arith.negf %618 : vector<1x256xf32>
    %620 = math.exp %619 : vector<1x256xf32>
    %cst_113 = arith.constant 1.000000e+00 : f32
    %621 = vector.broadcast %cst_113 : f32 to vector<1x256xf32>
    %622 = arith.addf %621, %620 : vector<1x256xf32>
    %623 = arith.divf %621, %622 : vector<1x256xf32>
    %624 = vector.broadcast %623 : vector<1x256xf32> to vector<32x256xf32>
    %625 = arith.mulf %40, %624 : vector<32x256xf32>
    %c0_114 = arith.constant 0 : index
    %c0_115 = arith.constant 0 : index
    %c0_116 = arith.constant 0 : index
    %626 = vector.load %arg8[%c0_114, %c0_115, %c0_116] : memref<1x32x256xf32, #tpu.memory_space<vmem>>, vector<1x32x256xf32>
    %627 = vector.shape_cast %626 : vector<1x32x256xf32> to vector<32x256xf32>
    %628 = vector.shape_cast %625 : vector<32x256xf32> to vector<1x32x256xf32>
    tpu.vector_store %arg8[%c0_114, %c0_115, %c0_116], %628 {strides = array<i32>} : memref<1x32x256xf32, #tpu.memory_space<vmem>>, vector<1x32x256xf32>,
    return
  }
  func.func @transform_0(%arg0: i32) -> (i32, i32, i32) {
    %c0_i32 = arith.constant 0 : i32
    %c0_i32_0 = arith.constant 0 : i32
    %c0_i32_1 = arith.constant 0 : i32
    return %arg0, %c0_i32, %c0_i32_0 : i32, i32, i32
  }
  func.func @transform_1(%arg0: i32) -> (i32, i32) {
    %c0_i32 = arith.constant 0 : i32
    %c0_i32_0 = arith.constant 0 : i32
    %c0_i32_1 = arith.constant 0 : i32
    return %c0_i32, %c0_i32_0 : i32, i32
  }
  func.func @transform_2(%arg0: i32) -> (i32, i32) {
    %c0_i32 = arith.constant 0 : i32
    %c0_i32_0 = arith.constant 0 : i32
    %c0_i32_1 = arith.constant 0 : i32
    return %c0_i32, %c0_i32_0 : i32, i32
  }
  func.func @transform_3(%arg0: i32) -> (i32, i32) {
    %c0_i32 = arith.constant 0 : i32
    %c0_i32_0 = arith.constant 0 : i32
    %c0_i32_1 = arith.constant 0 : i32
    return %c0_i32, %c0_i32_0 : i32, i32
  }
  func.func @transform_4(%arg0: i32) -> (i32, i32) {
    %c0_i32 = arith.constant 0 : i32
    %c0_i32_0 = arith.constant 0 : i32
    %c0_i32_1 = arith.constant 0 : i32
    return %c0_i32, %c0_i32_0 : i32, i32
  }
  func.func @transform_5(%arg0: i32) -> (i32, i32) {
    %c0_i32 = arith.constant 0 : i32
    %c0_i32_0 = arith.constant 0 : i32
    %c0_i32_1 = arith.constant 0 : i32
    return %c0_i32, %c0_i32_0 : i32, i32
  }
  func.func @transform_6(%arg0: i32) -> i32 {
    %c0_i32 = arith.constant 0 : i32
    %c0_i32_0 = arith.constant 0 : i32
    return %c0_i32 : i32
  }
  func.func @transform_7(%arg0: i32) -> (i32, i32, i32) {
    %c0_i32 = arith.constant 0 : i32
    %c0_i32_0 = arith.constant 0 : i32
    %c0_i32_1 = arith.constant 0 : i32
    return %arg0, %c0_i32, %c0_i32_0 : i32, i32, i32
  }
}

</mosaic_0001>

<llo_original>
// kernel: tpu_custom_call.1
$region0: #{tpu_custom_call.1}
  #allocation0 [shape = 'u32[]', space=smem, size = 0x4, offset = 0x4, fixed_abs, tag = 'smem constant byte address 0x4 - core index']
  #allocation1 [shape = 'u32[144,128]{1,0:T(1,128)}', space=vmem, size = 0x12000, scoped, tag = 'internal scratch']
  #allocation2 [shape = 'f32[2,512]{1,0:T(2,128)}', space=vmem, size = 0x1000, scoped, tag = 'scratch operand']
  %s0 = inlined_call_operand.hbm [shape: f32[2,32,256], index: 0, kind: input, shape index: {}]
  %s1 = inlined_call_operand.vmem [shape: f32[32,2], index: 1, kind: input, shape index: {}]
  %s2 = inlined_call_operand.vmem [shape: f32[1,2], index: 2, kind: input, shape index: {}]
  %s3 = inlined_call_operand.vmem [shape: f32[32,2], index: 3, kind: input, shape index: {}]
  %s4 = inlined_call_operand.vmem [shape: f32[32,1], index: 4, kind: input, shape index: {}]
  %s5 = inlined_call_operand.vmem [shape: f32[7,256], index: 5, kind: input, shape index: {}]
  %s6 = inlined_call_operand.vmem [shape: f32[98], index: 6, kind: input, shape index: {}]
  %s7 = inlined_call_operand.hbm [shape: f32[2,32,256], index: 7, kind: output, shape index: {}]
  %s8 = sld [smem:[#allocation0]]
  $region69: #{tpu_custom_call.1} parent=0
    _
  %s10 = ssub.s32 1, %s8
  %s11 = scalar_select 0, %s10, %s8
  $region1: #{tpu_custom_call.1} parent=0
    #allocation3 [shape = 'u8[65536]{0}', space=vmem, size = 0x10000, scoped, tag = 'input window, operand 0']
    #allocation4 [shape = 's32[2]{0}', space=sflag, size = 0x8, scoped, tag = 'scoped memory for tpu_custom_call.1']
    #allocation5 [shape = 's32[2]{0}', space=sflag, size = 0x8, scoped, tag = 'scoped memory for tpu_custom_call.1']
    #allocation6 [shape = 's32[2]{0}', space=sflag, size = 0x8, scoped, tag = 'scoped memory for tpu_custom_call.1']
    #allocation7 [shape = 'u8[512]{0}', space=smem, size = 0x200, scoped, tag = 'input window, operand 6, single buffered']
    #allocation8 [shape = 'u8[65536]{0}', space=vmem, size = 0x10000, scoped, tag = 'output window, operand 0']
    %12 = vsyncpa [#allocation4], 0
    %s13 = scalar_lea.sflag [#allocation4], 1
    %14 = vsyncpa %s13, 0
    %15 = vsyncpa [#allocation6], 0
    %16 = vsyncpa [#allocation5], 0
    %s17 = scalar_lea.sflag [#allocation5], 1
    %18 = vsyncpa %s17, 0
    loop: start=0, step=1, limit=4
    $region2: #{tpu_custom_call.1} parent=1 // loop_pre_header
      _
    $region3: #{tpu_custom_call.1} parent=1 // loop_header
      %s20 = sphi 0, %s24
      %p21 = scmp.ge.s32.totalorder %s20, 4
      %s30 = sphi 0, %s32
      %s33 = sphi 0, %s30
      %s34 = sphi 0, %s33
      %s50 = sphi 0, %s34
      %s54 = sphi 0, %s54
      %s56 = sphi 0, %s54
      %s57 = sphi 0, %s56
      %s71 = sphi 0, %s57
      %s75 = sphi 0, %s75
      %s77 = sphi 0, %s75
      %s78 = sphi 0, %s77
      %s92 = sphi 0, %s78
      %s96 = sphi 0, %s96
      %s98 = sphi 0, %s96
      %s99 = sphi 0, %s98
      %s113 = sphi 0, %s99
      %s117 = sphi 0, %s117
      %s119 = sphi 0, %s117
      %s120 = sphi 0, %s119
      %s134 = sphi 0, %s120
      %s138 = sphi 0, %s138
      %s140 = sphi 0, %s138
      %s141 = sphi 0, %s140
      %s155 = sphi 0, %s141
      %s159 = sphi 0, %s159
      %s161 = sphi 0, %s159
      %s162 = sphi 0, %s161
      %s176 = sphi 0, %s162
      %s182 = sphi 0, %s184
      %s185 = sphi 0, %s182
      %s186 = sphi 0, %s185
      %s202 = sphi 0, %s186
    $region4: #{tpu_custom_call.1} parent=1 // loop_header_branch
      %23 = sbr.rel (%p21) target = $region8
    $region5: #{tpu_custom_call.1} parent=1 // loop_body
      %s25 = ssub.s32 %s20, 1
      %s26 = ssub.s32 %s20, 2
      %s27 = sadd.s32 %s20, 1
      %s28 = ssub.s32 %s20, %s27
      %p29 = scmp.eq.s32.totalorder %s28, 0
      %s31 = sadd.s32 %s30, 1
      %s32 = scalar_select %p29, %s30, %s31
      %p35 = pneg %p29
      %p36 = scmp.eq.s32.totalorder %s20, 1
      %p37 = por %p35, %p36
      %p38 = scmp.ne.s32.totalorder %s30, %s33
      %p39 = scmp.eq.s32.totalorder %s20, 0
      %p40 = por %p38, %p39
      %p41 = scmp.ne.s32.totalorder %s30, %s33
      %p42 = scmp.eq.s32.totalorder %s25, 1
      %p43 = por %p41, %p42
      %p44 = scmp.ne.s32.totalorder %s33, %s34
      %p45 = scmp.eq.s32.totalorder %s25, 0
      %p46 = por %p44, %p45
      %p47 = scmp.ne.s32.totalorder %s33, %s34
      %p48 = scmp.eq.s32.totalorder %s26, 1
      %p49 = por %p47, %p48
      %p51 = scmp.ne.s32.totalorder %s34, %s50
      %p52 = scmp.eq.s32.totalorder %s26, 0
      %p53 = por %p51, %p52
      %s55 = sadd.s32 %s54, 1
      %p58 = scmp.eq.s32.totalorder %s20, 1
      %p59 = scmp.ne.s32.totalorder %s54, %s56
      %p60 = scmp.eq.s32.totalorder %s20, 0
      %p61 = por %p59, %p60
      %p62 = scmp.ne.s32.totalorder %s54, %s56
      %p63 = scmp.eq.s32.totalorder %s25, 1
      %p64 = por %p62, %p63
      %p65 = scmp.ne.s32.totalorder %s56, %s57
      %p66 = scmp.eq.s32.totalorder %s25, 0
      %p67 = por %p65, %p66
      %p68 = scmp.ne.s32.totalorder %s56, %s57
      %p69 = scmp.eq.s32.totalorder %s26, 1
      %p70 = por %p68, %p69
      %p72 = scmp.ne.s32.totalorder %s57, %s71
      %p73 = scmp.eq.s32.totalorder %s26, 0
      %p74 = por %p72, %p73
      %s76 = sadd.s32 %s75, 1
      %p79 = scmp.eq.s32.totalorder %s20, 1
      %p80 = scmp.ne.s32.totalorder %s75, %s77
      %p81 = scmp.eq.s32.totalorder %s20, 0
      %p82 = por %p80, %p81
      %p83 = scmp.ne.s32.totalorder %s75, %s77
      %p84 = scmp.eq.s32.totalorder %s25, 1
      %p85 = por %p83, %p84
      %p86 = scmp.ne.s32.totalorder %s77, %s78
      %p87 = scmp.eq.s32.totalorder %s25, 0
      %p88 = por %p86, %p87
      %p89 = scmp.ne.s32.totalorder %s77, %s78
      %p90 = scmp.eq.s32.totalorder %s26, 1
      %p91 = por %p89, %p90
      %p93 = scmp.ne.s32.totalorder %s78, %s92
      %p94 = scmp.eq.s32.totalorder %s26, 0
      %p95 = por %p93, %p94
      %s97 = sadd.s32 %s96, 1
      %p100 = scmp.eq.s32.totalorder %s20, 1
      %p101 = scmp.ne.s32.totalorder %s96, %s98
      %p102 = scmp.eq.s32.totalorder %s20, 0
      %p103 = por %p101, %p102
      %p104 = scmp.ne.s32.totalorder %s96, %s98
      %p105 = scmp.eq.s32.totalorder %s25, 1
      %p106 = por %p104, %p105
      %p107 = scmp.ne.s32.totalorder %s98, %s99
      %p108 = scmp.eq.s32.totalorder %s25, 0
      %p109 = por %p107, %p108
      %p110 = scmp.ne.s32.totalorder %s98, %s99
      %p111 = scmp.eq.s32.totalorder %s26, 1
      %p112 = por %p110, %p111
      %p114 = scmp.ne.s32.totalorder %s99, %s113
      %p115 = scmp.eq.s32.totalorder %s26, 0
      %p116 = por %p114, %p115
      %s118 = sadd.s32 %s117, 1
      %p121 = scmp.eq.s32.totalorder %s20, 1
      %p122 = scmp.ne.s32.totalorder %s117, %s119
      %p123 = scmp.eq.s32.totalorder %s20, 0
      %p124 = por %p122, %p123
      %p125 = scmp.ne.s32.totalorder %s117, %s119
      %p126 = scmp.eq.s32.totalorder %s25, 1
      %p127 = por %p125, %p126
      %p128 = scmp.ne.s32.totalorder %s119, %s120
      %p129 = scmp.eq.s32.totalorder %s25, 0
      %p130 = por %p128, %p129
      %p131 = scmp.ne.s32.totalorder %s119, %s120
      %p132 = scmp.eq.s32.totalorder %s26, 1
      %p133 = por %p131, %p132
      %p135 = scmp.ne.s32.totalorder %s120, %s134
      %p136 = scmp.eq.s32.totalorder %s26, 0
      %p137 = por %p135, %p136
      %s139 = sadd.s32 %s138, 1
      %p142 = scmp.eq.s32.totalorder %s20, 1
      %p143 = scmp.ne.s32.totalorder %s138, %s140
      %p144 = scmp.eq.s32.totalorder %s20, 0
      %p145 = por %p143, %p144
      %p146 = scmp.ne.s32.totalorder %s138, %s140
      %p147 = scmp.eq.s32.totalorder %s25, 1
      %p148 = por %p146, %p147
      %p149 = scmp.ne.s32.totalorder %s140, %s141
      %p150 = scmp.eq.s32.totalorder %s25, 0
      %p151 = por %p149, %p150
      %p152 = scmp.ne.s32.totalorder %s140, %s141
      %p153 = scmp.eq.s32.totalorder %s26, 1
      %p154 = por %p152, %p153
      %p156 = scmp.ne.s32.totalorder %s141, %s155
      %p157 = scmp.eq.s32.totalorder %s26, 0
      %p158 = por %p156, %p157
      %s160 = sadd.s32 %s159, 1
      %p163 = scmp.eq.s32.totalorder %s20, 1
      %p164 = scmp.ne.s32.totalorder %s159, %s161
      %p165 = scmp.eq.s32.totalorder %s20, 0
      %p166 = por %p164, %p165
      %p167 = scmp.ne.s32.totalorder %s159, %s161
      %p168 = scmp.eq.s32.totalorder %s25, 1
      %p169 = por %p167, %p168
      %p170 = scmp.ne.s32.totalorder %s161, %s162
      %p171 = scmp.eq.s32.totalorder %s25, 0
      %p172 = por %p170, %p171
      %p173 = scmp.ne.s32.totalorder %s161, %s162
      %p174 = scmp.eq.s32.totalorder %s26, 1
      %p175 = por %p173, %p174
      %p177 = scmp.ne.s32.totalorder %s162, %s176
      %p178 = scmp.eq.s32.totalorder %s26, 0
      %p179 = por %p177, %p178
      %s180 = ssub.s32 %s20, %s27
      %p181 = scmp.eq.s32.totalorder %s180, 0
      %s183 = sadd.s32 %s182, 1
      %s184 = scalar_select %p181, %s182, %s183
      %p187 = pneg %p181
      %p188 = scmp.eq.s32.totalorder %s20, 1
      %p189 = por %p187, %p188
      %p190 = scmp.ne.s32.totalorder %s182, %s185
      %p191 = scmp.eq.s32.totalorder %s20, 0
      %p192 = por %p190, %p191
      %p193 = scmp.ne.s32.totalorder %s182, %s185
      %p194 = scmp.eq.s32.totalorder %s25, 1
      %p195 = por %p193, %p194
      %p196 = scmp.ne.s32.totalorder %s185, %s186
      %p197 = scmp.eq.s32.totalorder %s25, 0
      %p198 = por %p196, %p197
      %p199 = scmp.ne.s32.totalorder %s185, %s186
      %p200 = scmp.eq.s32.totalorder %s26, 1
      %p201 = por %p199, %p200
      %p203 = scmp.ne.s32.totalorder %s186, %s202
      %p204 = scmp.eq.s32.totalorder %s26, 0
      %p205 = por %p203, %p204
      %p206 = scmp.le.s32.totalorder 1, %s20
      %p207 = scmp.lt.s32.totalorder %s20, 3
      %p208 = pnand %p206, %p207
      %p209 = pneg %p208
      // Predicated region
      $region9: #{tpu_custom_call.1} parent=5 // pred_check
        _
      $region10: #{tpu_custom_call.1} parent=5 // pred_check_branch
        %211 = sbr.rel (%p208) target = $region12
      $region11: #{tpu_custom_call.1} parent=5 // pred_region
        %s212 = ssub.s32 %s20, 1
        // Predicated region
        $region13: #{tpu_custom_call.1} parent=11 // pred_check
          %p213 = pneg %p67
        $region14: #{tpu_custom_call.1} parent=11 // pred_check_branch
          %215 = sbr.rel (%p213) target = $region16
        $region15: #{tpu_custom_call.1} parent=11 // pred_region
          _
        $region16: #{tpu_custom_call.1} parent=11 // pred_fallthru
          _
        // Predicated region
        $region17: #{tpu_custom_call.1} parent=11 // pred_check
          %p216 = pneg %p88
        $region18: #{tpu_custom_call.1} parent=11 // pred_check_branch
          %218 = sbr.rel (%p216) target = $region20
        $region19: #{tpu_custom_call.1} parent=11 // pred_region
          _
        $region20: #{tpu_custom_call.1} parent=11 // pred_fallthru
          _
        // Predicated region
        $region21: #{tpu_custom_call.1} parent=11 // pred_check
          %p219 = pneg %p109
        $region22: #{tpu_custom_call.1} parent=11 // pred_check_branch
          %221 = sbr.rel (%p219) target = $region24
        $region23: #{tpu_custom_call.1} parent=11 // pred_region
          _
        $region24: #{tpu_custom_call.1} parent=11 // pred_fallthru
          _
        // Predicated region
        $region25: #{tpu_custom_call.1} parent=11 // pred_check
          %p222 = pneg %p130
        $region26: #{tpu_custom_call.1} parent=11 // pred_check_branch
          %224 = sbr.rel (%p222) target = $region28
        $region27: #{tpu_custom_call.1} parent=11 // pred_region
          _
        $region28: #{tpu_custom_call.1} parent=11 // pred_fallthru
          _
        // Predicated region
        $region29: #{tpu_custom_call.1} parent=11 // pred_check
          %p225 = pneg %p151
        $region30: #{tpu_custom_call.1} parent=11 // pred_check_branch
          %227 = sbr.rel (%p225) target = $region32
        $region31: #{tpu_custom_call.1} parent=11 // pred_region
          _
        $region32: #{tpu_custom_call.1} parent=11 // pred_fallthru
          _
        // Predicated region
        $region33: #{tpu_custom_call.1} parent=11 // pred_check
          %p228 = pneg %p172
        $region34: #{tpu_custom_call.1} parent=11 // pred_check_branch
          %230 = sbr.rel (%p228) target = $region36
        $region35: #{tpu_custom_call.1} parent=11 // pred_region
          %s232 = ssub.s32 16, 16
          %233 = vsyncadd [#allocation6], %s232
          %s235 = sshll.u32 %s6, 4
          %s236 = int_to_ptr.vmem [resolvable:$true] %s235
          %238 = dma.vmem_to_smem %s236, 16, [#allocation7], [#allocation6]
        $region36: #{tpu_custom_call.1} parent=11 // pred_fallthru
          _
      $region12: #{tpu_custom_call.1} parent=5 // pred_fallthru
        _
      %p239 = scmp.lt.s32.totalorder %s20, 2
      // Predicated region
      $region37: #{tpu_custom_call.1} parent=5 // pred_check
        %p240 = pneg %p239
      $region38: #{tpu_custom_call.1} parent=5 // pred_check_branch
        %242 = sbr.rel (%p240) target = $region40
      $region39: #{tpu_custom_call.1} parent=5 // pred_region
        // Predicated region
        $region41: #{tpu_custom_call.1} parent=39 // pred_check
          %p243 = pneg %p40
        $region42: #{tpu_custom_call.1} parent=39 // pred_check_branch
          %245 = sbr.rel (%p243) target = $region44
        $region43: #{tpu_custom_call.1} parent=39 // pred_region
          %s246 = sand.u32 %s30, 1
          %s247 = scalar_lea.sflag [#allocation4], %s246
          %s248 = sand.u32 %s30, 1
          %s249 = smul.addr %s248, 64
          %s250 = scalar_lea.vmem [#allocation3], %s249
          %s252 = ssub.s32 1024, 1024
          %253 = vsyncadd %s247, %s252
          %s254 = smul.addr %s20, 8
          %s255 = smul.addr %s254, 128
          %s256 = scalar_lea.hbm %s0, %s255
          %s257 = sshll.u32 %s250, 4
          %s258 = int_to_ptr.vmem [resolvable:$true] %s257
          %263 = dma.hbm_to_vmem [thread:$0]  %s256, 1024, %s258, %s247, 256, 256, 16
        $region44: #{tpu_custom_call.1} parent=39 // pred_fallthru
          _
      $region40: #{tpu_custom_call.1} parent=5 // pred_fallthru
        _
      %p264 = scmp.le.s32.totalorder 1, %s20
      %p265 = scmp.lt.s32.totalorder %s20, 3
      %p266 = pnand %p264, %p265
      %p267 = pneg %p266
      // Predicated region
      $region45: #{tpu_custom_call.1} parent=5 // pred_check
        _
      $region46: #{tpu_custom_call.1} parent=5 // pred_check_branch
        %269 = sbr.rel (%p266) target = $region48
      $region47: #{tpu_custom_call.1} parent=5 // pred_region
        %s270 = ssub.s32 %s20, 1
        %s271 = sand.u32 %s33, 1
        %s272 = scalar_lea.sflag [#allocation4], %s271
        %s273 = sand.u32 %s33, 1
        %s274 = smul.addr %s273, 64
        %s275 = scalar_lea.vmem [#allocation3], %s274
        // Predicated region
        $region49: #{tpu_custom_call.1} parent=47 // pred_check
          %p276 = pneg %p46
        $region50: #{tpu_custom_call.1} parent=47 // pred_check_branch
          %278 = sbr.rel (%p276) target = $region52
        $region51: #{tpu_custom_call.1} parent=47 // pred_region
          %279 = dma.done %s272, 1024
        $region52: #{tpu_custom_call.1} parent=47 // pred_fallthru
          _
        // Predicated region
        $region53: #{tpu_custom_call.1} parent=47 // pred_check
          %p280 = pneg %p172
        $region54: #{tpu_custom_call.1} parent=47 // pred_check_branch
          %282 = sbr.rel (%p280) target = $region56
        $region55: #{tpu_custom_call.1} parent=47 // pred_region
          %283 = dma.done [#allocation6], 16
        $region56: #{tpu_custom_call.1} parent=47 // pred_fallthru
          _
        %284 = sfence
        %s285 = sand.u32 %s33, 1
        %s286 = scalar_lea.sflag [#allocation4], %s285
        %s287 = sand.u32 %s33, 1
        %s288 = smul.addr %s287, 64
        %s289 = scalar_lea.vmem [#allocation3], %s288
        %p290 = pneg %p46
        %p291 = pneg %p43
        %p292 = pneg %p67
        %p293 = pneg %p64
        %p294 = pneg %p88
        %p295 = pneg %p85
        %p296 = pneg %p109
        %p297 = pneg %p106
        %p298 = pneg %p130
        %p299 = pneg %p127
        %p300 = pneg %p151
        %p301 = pneg %p148
        %p302 = pneg %p172
        %p303 = pneg %p169
        %p304 = pneg %p198
        %p305 = pneg %p195
        %s306 = sand.u32 %s185, 1
        %s307 = scalar_lea.sflag [#allocation5], %s306
        %s308 = sand.u32 %s185, 1
        %s309 = smul.addr %s308, 64
        %s310 = scalar_lea.vmem [#allocation8], %s309
        %v311 = vld [vmem:[%s275] sm:$0xff]
        %v312 = vld [vmem:[%s275 + $0x8] sm:$0xff]
        %v313 = vld [vmem:[%s275 + $0x10] sm:$0xff]
        %v314 = vld [vmem:[%s275 + $0x18] sm:$0xff]
        %v315 = vld [vmem:[%s275 + $0x20] sm:$0xff]
        %v316 = vld [vmem:[%s275 + $0x28] sm:$0xff]
        %v317 = vld [vmem:[%s275 + $0x30] sm:$0xff]
        %v318 = vld [vmem:[%s275 + $0x38] sm:$0xff]
        %v319 = vld [vmem:[%s1] sm:$0xff]
        %v320 = vld [vmem:[%s1 + $0x8] sm:$0xff]
        %v321 = vld [vmem:[%s1 + $0x10] sm:$0xff]
        %v322 = vld [vmem:[%s1 + $0x18] sm:$0xff]
        %v323 = vld [vmem:[%s2] sm:$0x1]
        %v324 = vld [vmem:[%s3] sm:$0xff]
        %v325 = vld [vmem:[%s3 + $0x8] sm:$0xff]
        %v326 = vld [vmem:[%s3 + $0x10] sm:$0xff]
        %v327 = vld [vmem:[%s3 + $0x18] sm:$0xff]
        %v328 = vld [vmem:[%s4] sm:$0xff]
        %v329 = vld [vmem:[%s4 + $0x8] sm:$0xff]
        %v330 = vld [vmem:[%s4 + $0x10] sm:$0xff]
        %v331 = vld [vmem:[%s4 + $0x18] sm:$0xff]
        %v332 = vadd.f32 %v311, %v312
        %333 = vadd.xlane.f32.xlu0 %v332
        %v334 = vpop.xlane.xlu0 %333
        %v335 = vadd.f32 %v313, %v314
        %336 = vadd.xlane.f32.xlu0 %v335
        %v337 = vpop.xlane.xlu0 %336
        %v338 = vadd.f32 %v315, %v316
        %339 = vadd.xlane.f32.xlu0 %v338
        %v340 = vpop.xlane.xlu0 %339
        %v341 = vadd.f32 %v317, %v318
        %342 = vadd.xlane.f32.xlu0 %v341
        %v343 = vpop.xlane.xlu0 %342
        %v344 = vmul.f32 %v334, 0.00390625
        %v345 = vmul.f32 %v337, 0.00390625
        %v346 = vmul.f32 %v340, 0.00390625
        %v347 = vmul.f32 %v343, 0.00390625
        %v348 = vmax.f32 %v311, %v312
        %349 = vmax.xlane.f32.xlu0 %v348
        %v350 = vpop.xlane.xlu0 %349
        %v351 = vmax.f32 %v313, %v314
        %352 = vmax.xlane.f32.xlu0 %v351
        %v353 = vpop.xlane.xlu0 %352
        %v354 = vmax.f32 %v315, %v316
        %355 = vmax.xlane.f32.xlu0 %v354
        %v356 = vpop.xlane.xlu0 %355
        %v357 = vmax.f32 %v317, %v318
        %358 = vmax.xlane.f32.xlu0 %v357
        %v359 = vpop.xlane.xlu0 %358
        %v360 = vmul.f32 %v319, %v344
        %v361 = vmul.f32 %v320, %v345
        %v362 = vmul.f32 %v321, %v346
        %v363 = vmul.f32 %v322, %v347
        %vm364 = vcmask 15360
        %v365 = vsel %vm364, %v360, 0.0
        %v366 = vsel %vm364, %v361, 0.0
        %v367 = vadd.f32 %v365, %v366
        %v368 = vsel %vm364, %v362, 0.0
        %v369 = vadd.f32 %v367, %v368
        %v370 = vsel %vm364, %v363, 0.0
        %v371 = vadd.f32 %v369, %v370
        %v372 = vrot.slane %v371, 4
        %v373 = vadd.f32 %v371, %v372
        %v374 = vrot.slane %v373, 2
        %v375 = vadd.f32 %v373, %v374
        %v376 = vrot.slane %v375, 1
        %v377 = vadd.f32 %v375, %v376
        %v378 = vadd.f32 %v377, %v323
        %v379 = vmax.f32 %v378, 0.0
        %v380 = vmul.f32 %v319, %v350
        %v381 = vmul.f32 %v320, %v353
        %v382 = vmul.f32 %v321, %v356
        %v383 = vmul.f32 %v322, %v359
        %v384 = vsel %vm364, %v380, 0.0
        %v385 = vsel %vm364, %v381, 0.0
        %v386 = vadd.f32 %v384, %v385
        %v387 = vsel %vm364, %v382, 0.0
        %v388 = vadd.f32 %v386, %v387
        %v389 = vsel %vm364, %v383, 0.0
        %v390 = vadd.f32 %v388, %v389
        %v391 = vrot.slane %v390, 4
        %v392 = vadd.f32 %v390, %v391
        %v393 = vrot.slane %v392, 2
        %v394 = vadd.f32 %v392, %v393
        %v395 = vrot.slane %v394, 1
        %v396 = vadd.f32 %v394, %v395
        %v397 = vadd.f32 %v396, %v323
        %v398 = vmax.f32 %v397, 0.0
        %v399 = vadd.f32 %v379, %v398
        %v400 = vlaneseq
        %v401 = vshrl.u32 %v400, 7
        %v402 = vsub.s32 0, %v401
        %v403 = vrot.slane %v399, %v402
        %v404 = vmul.f32 %v324, %v403
        %v405 = vmul.f32 %v325, %v403
        %v406 = vmul.f32 %v326, %v403
        %v407 = vmul.f32 %v327, %v403
        %v408 = vsel %vm364, %v404, 0.0
        %409 = vadd.xlane.f32.xlu0 %v408
        %v410 = vpop.xlane.xlu0 %409
        %v411 = vsel %vm364, %v405, 0.0
        %412 = vadd.xlane.f32.xlu0 %v411
        %v413 = vpop.xlane.xlu0 %412
        %v414 = vsel %vm364, %v406, 0.0
        %415 = vadd.xlane.f32.xlu0 %v414
        %v416 = vpop.xlane.xlu0 %415
        %v417 = vsel %vm364, %v407, 0.0
        %418 = vadd.xlane.f32.xlu0 %v417
        %v419 = vpop.xlane.xlu0 %418
        %v420 = vmul.f32 %v328, 2.0
        %v421 = vmul.f32 %v329, 2.0
        %v422 = vmul.f32 %v330, 2.0
        %v423 = vmul.f32 %v331, 2.0
        %v424 = vadd.f32 %v410, %v420
        %v425 = vadd.f32 %v413, %v421
        %v426 = vadd.f32 %v416, %v422
        %v427 = vadd.f32 %v419, %v423
        %v428 = vxor.u32 %v424, 2147483648
        %v429 = vxor.u32 %v425, 2147483648
        %v430 = vxor.u32 %v426, 2147483648
        %v431 = vxor.u32 %v427, 2147483648
        %v432 = vmul.f32 %v428, 1.442695
        %v433 = vpow.pop %v432
        %v434 = vmul.f32 %v429, 1.442695
        %v435 = vpow.pop %v434
        %v436 = vmul.f32 %v430, 1.442695
        %v437 = vpow.pop %v436
        %v438 = vmul.f32 %v431, 1.442695
        %v439 = vpow.pop %v438
        %v440 = vadd.f32 %v433, 1.0
        %v441 = vadd.f32 %v435, 1.0
        %v442 = vadd.f32 %v437, 1.0
        %v443 = vadd.f32 %v439, 1.0
        %v444 = vrcp.pop %v440
        %v445 = vmul.f32 1.0, %v444
        %v446 = vrcp.pop %v441
        %v447 = vmul.f32 1.0, %v446
        %v448 = vrcp.pop %v442
        %v449 = vmul.f32 1.0, %v448
        %v450 = vrcp.pop %v443
        %v451 = vmul.f32 1.0, %v450
        %453 = vset.pattern.permute.xlu0 0
        %454 = vperm.xlu0 %453, %v445
        %v455 = vpop.permute.xlu0 %454
        %458 = vset.pattern.permute.xlu0 0
        %459 = vperm.xlu0 %458, %v447
        %v460 = vpop.permute.xlu0 %459
        %463 = vset.pattern.permute.xlu0 0
        %464 = vperm.xlu0 %463, %v449
        %v465 = vpop.permute.xlu0 %464
        %468 = vset.pattern.permute.xlu0 0
        %469 = vperm.xlu0 %468, %v451
        %v470 = vpop.permute.xlu0 %469
        %v472 = vmul.f32 %v311, %v455
        %v473 = vmul.f32 %v312, %v455
        %v474 = vmul.f32 %v313, %v460
        %v475 = vmul.f32 %v314, %v460
        %v476 = vmul.f32 %v315, %v465
        %v477 = vmul.f32 %v316, %v465
        %v478 = vmul.f32 %v317, %v470
        %v479 = vmul.f32 %v318, %v470
        %v480 = vmax.f32 %v472, %v476
        %v481 = vmax.f32 %v474, %v478
        %v482 = vmax.f32 %v480, %v481
        %v483 = vrot.slane %v482, 4
        %v484 = vmax.f32 %v482, %v483
        %v485 = vrot.slane %v484, 2
        %v486 = vmax.f32 %v484, %v485
        %v487 = vrot.slane %v486, 1
        %v488 = vmax.f32 %v486, %v487
        %v489 = vmax.f32 %v473, %v477
        %v490 = vmax.f32 %v475, %v479
        %v491 = vmax.f32 %v489, %v490
        %v492 = vrot.slane %v491, 4
        %v493 = vmax.f32 %v491, %v492
        %v494 = vrot.slane %v493, 2
        %v495 = vmax.f32 %v493, %v494
        %v496 = vrot.slane %v495, 1
        %v497 = vmax.f32 %v495, %v496
        %v498 = vadd.f32 %v472, %v474
        %v499 = vadd.f32 %v498, %v476
        %v500 = vadd.f32 %v499, %v478
        %v501 = vrot.slane %v500, 4
        %v502 = vadd.f32 %v500, %v501
        %v503 = vrot.slane %v502, 2
        %v504 = vadd.f32 %v502, %v503
        %v505 = vrot.slane %v504, 1
        %v506 = vadd.f32 %v504, %v505
        %v507 = vadd.f32 %v473, %v475
        %v508 = vadd.f32 %v507, %v477
        %v509 = vadd.f32 %v508, %v479
        %v510 = vrot.slane %v509, 4
        %v511 = vadd.f32 %v509, %v510
        %v512 = vrot.slane %v511, 2
        %v513 = vadd.f32 %v511, %v512
        %v514 = vrot.slane %v513, 1
        %v515 = vadd.f32 %v513, %v514
        %v516 = vmul.f32 %v506, 0.03125
        %v517 = vmul.f32 %v515, 0.03125
        %518 = vst [vmem:[#allocation2] sm:$0xff] 0.0
        %v521 = vcombine.low %v488, %v497
        %v523 = vunpack.c.l.s4 1966171168
        %v524 = vunpack.c.0.s8 %v523
        %v525 = vlaneseq
        %v526 = vshrl.u32 %v525, 7
        %v527 = vsub.s32 %v524, %v526
        %v528 = vrot.slane %v521, %v527
        %v530 = vunpack.c.l.s4 1966171168
        %v531 = vunpack.c.0.s8 %v530
        %v532 = vlaneseq
        %v533 = vshrl.u32 %v532, 7
        %v534 = vsub.s32 %v531, %v533
        %v535 = vrot.slane %v528, %v534
        %v537 = vlaneseq
        %vm538 = vcmp.ge.s32.totalorder %v537, 0
        %vm539 = vcmp.lt.s32.totalorder %v537, 256
        %vm540 = vmand %vm538, %vm539
        %s541 = scalar_lea.vmem [#allocation2], 2
        %542 = vst.msk [vmem:[%s541] ss:$2 sm:$0x3] %vm540, %v535
        %v545 = vcombine.low %v516, %v517
        %v547 = vunpack.c.l.s4 1966171168
        %v548 = vunpack.c.0.s8 %v547
        %v549 = vlaneseq
        %v550 = vshrl.u32 %v549, 7
        %v551 = vsub.s32 %v548, %v550
        %v552 = vrot.slane %v545, %v551
        %v554 = vunpack.c.l.s4 1966171168
        %v555 = vunpack.c.0.s8 %v554
        %v556 = vlaneseq
        %v557 = vshrl.u32 %v556, 7
        %v558 = vsub.s32 %v555, %v557
        %v559 = vrot.slane %v552, %v558
        %s561 = scalar_lea.vmem [#allocation2], 3
        %562 = vst.msk [vmem:[%s561] ss:$2 sm:$0x3] %vm540, %v559
        %v563 = vld [vmem:[#allocation2] sm:$0x3f]
        %s564 = sld [smem:[#allocation7]]
        %v565 = vstv %s564
        %v566 = vmul.f32 %v563, %v565
        %v567 = vadd.f32 %v566, 0.0
        %s568 = sld [smem:[#allocation7 + $0x31]]
        %v569 = vstv %s568
        %v570 = vmul.f32 %v563, %v569
        %v572 = vrot.slane %v570, 7
        %v573 = vrot.slane %v572, 2
        %v575 = vadd.f32 %v567, %v573
        %s576 = sld [smem:[#allocation7 + $0x7]]
        %v577 = vstv %s576
        %v578 = vmul.f32 %v563, %v577
        %580 = vrot.lane.b32.xlu0 %v578, 112
        %v581 = vpop.permute.xlu0 %580
        %v582 = vrot.slane %v581, 2
        %vm583 = vcmask 916480
        %v584 = vsel %vm583, %v581, %v582
        %v586 = vadd.f32 %v575, %v584
        %s587 = sld [smem:[#allocation7 + $0x38]]
        %v588 = vstv %s587
        %v589 = vmul.f32 %v563, %v588
        %v591 = vrot.slane %v589, 7
        %v592 = vrot.slane %v591, 2
        %593 = vrot.lane.b32.xlu0 %v592, 112
        %v594 = vpop.permute.xlu0 %593
        %v595 = vrot.slane %v594, 2
        %v596 = vsel %vm583, %v594, %v595
        %v598 = vadd.f32 %v586, %v596
        %s599 = sld [smem:[#allocation7 + $0xe]]
        %v600 = vstv %s599
        %v601 = vmul.f32 %v563, %v600
        %603 = vrot.lane.b32.xlu0 %v601, 96
        %v604 = vpop.permute.xlu0 %603
        %v605 = vrot.slane %v604, 2
        %vm606 = vcmask 785408
        %v607 = vsel %vm606, %v604, %v605
        %v609 = vadd.f32 %v598, %v607
        %s610 = sld [smem:[#allocation7 + $0x3f]]
        %v611 = vstv %s610
        %v612 = vmul.f32 %v563, %v611
        %v614 = vrot.slane %v612, 7
        %v615 = vrot.slane %v614, 2
        %616 = vrot.lane.b32.xlu0 %v615, 96
        %v617 = vpop.permute.xlu0 %616
        %v618 = vrot.slane %v617, 2
        %v619 = vsel %vm606, %v617, %v618
        %v621 = vadd.f32 %v609, %v619
        %s622 = sld [smem:[#allocation7 + $0x15]]
        %v623 = vstv %s622
        %v624 = vmul.f32 %v563, %v623
        %626 = vrot.lane.b32.xlu0 %v624, 80
        %v627 = vpop.permute.xlu0 %626
        %v628 = vrot.slane %v627, 2
        %vm629 = vcmask 654336
        %v630 = vsel %vm629, %v627, %v628
        %v632 = vadd.f32 %v621, %v630
        %s633 = sld [smem:[#allocation7 + $0x46]]
        %v634 = vstv %s633
        %v635 = vmul.f32 %v563, %v634
        %v637 = vrot.slane %v635, 7
        %v638 = vrot.slane %v637, 2
        %639 = vrot.lane.b32.xlu0 %v638, 80
        %v640 = vpop.permute.xlu0 %639
        %v641 = vrot.slane %v640, 2
        %v642 = vsel %vm629, %v640, %v641
        %v644 = vadd.f32 %v632, %v642
        %v645 = vld [vmem:[#allocation2 + $0x2] sm:$0x3f]
        %s646 = sld [smem:[#allocation7 + $0x1c]]
        %v647 = vstv %s646
        %v648 = vmul.f32 %v645, %v647
        %650 = vrot.lane.b32.xlu0 %v648, 64
        %v651 = vpop.permute.xlu0 %650
        %v652 = vrot.slane %v651, 6
        %vm653 = vcmask 523264
        %v654 = vsel %vm653, %v652, %v651
        %v656 = vadd.f32 %v644, %v654
        %s657 = sld [smem:[#allocation7 + $0x4d]]
        %v658 = vstv %s657
        %v659 = vmul.f32 %v645, %v658
        %v661 = vrot.slane %v659, 7
        %v662 = vrot.slane %v661, 2
        %663 = vrot.lane.b32.xlu0 %v662, 64
        %v664 = vpop.permute.xlu0 %663
        %v665 = vrot.slane %v664, 6
        %v666 = vsel %vm653, %v665, %v664
        %v668 = vadd.f32 %v656, %v666
        %s669 = sld [smem:[#allocation7 + $0x23]]
        %v670 = vstv %s669
        %v671 = vmul.f32 %v645, %v670
        %673 = vrot.lane.b32.xlu0 %v671, 48
        %v674 = vpop.permute.xlu0 %673
        %v675 = vrot.slane %v674, 6
        %vm676 = vcmask 392192
        %v677 = vsel %vm676, %v675, %v674
        %v679 = vadd.f32 %v668, %v677
        %s680 = sld [smem:[#allocation7 + $0x54]]
        %v681 = vstv %s680
        %v682 = vmul.f32 %v645, %v681
        %v684 = vrot.slane %v682, 7
        %v685 = vrot.slane %v684, 2
        %686 = vrot.lane.b32.xlu0 %v685, 48
        %v687 = vpop.permute.xlu0 %686
        %v688 = vrot.slane %v687, 6
        %v689 = vsel %vm676, %v688, %v687
        %v691 = vadd.f32 %v679, %v689
        %s692 = sld [smem:[#allocation7 + $0x2a]]
        %v693 = vstv %s692
        %v694 = vmul.f32 %v645, %v693
        %696 = vrot.lane.b32.xlu0 %v694, 32
        %v697 = vpop.permute.xlu0 %696
        %v698 = vrot.slane %v697, 6
        %vm699 = vcmask 261120
        %v700 = vsel %vm699, %v698, %v697
        %v702 = vadd.f32 %v691, %v700
        %s703 = sld [smem:[#allocation7 + $0x5b]]
        %v704 = vstv %s703
        %v705 = vmul.f32 %v645, %v704
        %v707 = vrot.slane %v705, 7
        %v708 = vrot.slane %v707, 2
        %709 = vrot.lane.b32.xlu0 %v708, 32
        %v710 = vpop.permute.xlu0 %709
        %v711 = vrot.slane %v710, 6
        %v712 = vsel %vm699, %v711, %v710
        %v714 = vadd.f32 %v702, %v712
        %v715 = vld [vmem:[%s5] ss:$8 sm:$0x3]
        %v718 = vunpack.c.l.s4 857870592
        %v719 = vunpack.c.0.s8 %v718
        %v720 = vlaneseq
        %v721 = vshrl.u32 %v720, 7
        %v722 = vsub.s32 %v719, %v721
        %v723 = vrot.slane %v715, %v722
        %724 = vrot.lane.b32.xlu0 %v723, 77
        %v725 = vpop.permute.xlu0 %724
        %v726 = vrot.slane %v725, 6
        %vm727 = vcmask 629760
        %v728 = vsel %vm727, %v726, %v725
        %v730 = vmul.f32 %v714, %v728
        %v731 = vadd.f32 %v730, 0.0
        %s732 = sld [smem:[#allocation7 + $0x1]]
        %v733 = vstv %s732
        %v734 = vmul.f32 %v563, %v733
        %v735 = vadd.f32 %v734, 0.0
        %s736 = sld [smem:[#allocation7 + $0x32]]
        %v737 = vstv %s736
        %v738 = vmul.f32 %v563, %v737
        %v740 = vrot.slane %v738, 7
        %v741 = vrot.slane %v740, 2
        %v743 = vadd.f32 %v735, %v741
        %s744 = sld [smem:[#allocation7 + $0x8]]
        %v745 = vstv %s744
        %v746 = vmul.f32 %v563, %v745
        %748 = vrot.lane.b32.xlu0 %v746, 112
        %v749 = vpop.permute.xlu0 %748
        %v750 = vrot.slane %v749, 2
        %v751 = vsel %vm583, %v749, %v750
        %v753 = vadd.f32 %v743, %v751
        %s754 = sld [smem:[#allocation7 + $0x39]]
        %v755 = vstv %s754
        %v756 = vmul.f32 %v563, %v755
        %v758 = vrot.slane %v756, 7
        %v759 = vrot.slane %v758, 2
        %760 = vrot.lane.b32.xlu0 %v759, 112
        %v761 = vpop.permute.xlu0 %760
        %v762 = vrot.slane %v761, 2
        %v763 = vsel %vm583, %v761, %v762
        %v765 = vadd.f32 %v753, %v763
        %s766 = sld [smem:[#allocation7 + $0xf]]
        %v767 = vstv %s766
        %v768 = vmul.f32 %v563, %v767
        %770 = vrot.lane.b32.xlu0 %v768, 96
        %v771 = vpop.permute.xlu0 %770
        %v772 = vrot.slane %v771, 2
        %v773 = vsel %vm606, %v771, %v772
        %v775 = vadd.f32 %v765, %v773
        %s776 = sld [smem:[#allocation7 + $0x40]]
        %v777 = vstv %s776
        %v778 = vmul.f32 %v563, %v777
        %v780 = vrot.slane %v778, 7
        %v781 = vrot.slane %v780, 2
        %782 = vrot.lane.b32.xlu0 %v781, 96
        %v783 = vpop.permute.xlu0 %782
        %v784 = vrot.slane %v783, 2
        %v785 = vsel %vm606, %v783, %v784
        %v787 = vadd.f32 %v775, %v785
        %s788 = sld [smem:[#allocation7 + $0x16]]
        %v789 = vstv %s788
        %v790 = vmul.f32 %v563, %v789
        %792 = vrot.lane.b32.xlu0 %v790, 80
        %v793 = vpop.permute.xlu0 %792
        %v794 = vrot.slane %v793, 2
        %v795 = vsel %vm629, %v793, %v794
        %v797 = vadd.f32 %v787, %v795
        %s798 = sld [smem:[#allocation7 + $0x47]]
        %v799 = vstv %s798
        %v800 = vmul.f32 %v563, %v799
        %v802 = vrot.slane %v800, 7
        %v803 = vrot.slane %v802, 2
        %804 = vrot.lane.b32.xlu0 %v803, 80
        %v805 = vpop.permute.xlu0 %804
        %v806 = vrot.slane %v805, 2
        %v807 = vsel %vm629, %v805, %v806
        %v809 = vadd.f32 %v797, %v807
        %s810 = sld [smem:[#allocation7 + $0x1d]]
        %v811 = vstv %s810
        %v812 = vmul.f32 %v645, %v811
        %814 = vrot.lane.b32.xlu0 %v812, 64
        %v815 = vpop.permute.xlu0 %814
        %v816 = vrot.slane %v815, 6
        %v817 = vsel %vm653, %v816, %v815
        %v819 = vadd.f32 %v809, %v817
        %s820 = sld [smem:[#allocation7 + $0x4e]]
        %v821 = vstv %s820
        %v822 = vmul.f32 %v645, %v821
        %v824 = vrot.slane %v822, 7
        %v825 = vrot.slane %v824, 2
        %826 = vrot.lane.b32.xlu0 %v825, 64
        %v827 = vpop.permute.xlu0 %826
        %v828 = vrot.slane %v827, 6
        %v829 = vsel %vm653, %v828, %v827
        %v831 = vadd.f32 %v819, %v829
        %s832 = sld [smem:[#allocation7 + $0x24]]
        %v833 = vstv %s832
        %v834 = vmul.f32 %v645, %v833
        %836 = vrot.lane.b32.xlu0 %v834, 48
        %v837 = vpop.permute.xlu0 %836
        %v838 = vrot.slane %v837, 6
        %v839 = vsel %vm676, %v838, %v837
        %v841 = vadd.f32 %v831, %v839
        %s842 = sld [smem:[#allocation7 + $0x55]]
        %v843 = vstv %s842
        %v844 = vmul.f32 %v645, %v843
        %v846 = vrot.slane %v844, 7
        %v847 = vrot.slane %v846, 2
        %848 = vrot.lane.b32.xlu0 %v847, 48
        %v849 = vpop.permute.xlu0 %848
        %v850 = vrot.slane %v849, 6
        %v851 = vsel %vm676, %v850, %v849
        %v853 = vadd.f32 %v841, %v851
        %s854 = sld [smem:[#allocation7 + $0x2b]]
        %v855 = vstv %s854
        %v856 = vmul.f32 %v645, %v855
        %858 = vrot.lane.b32.xlu0 %v856, 32
        %v859 = vpop.permute.xlu0 %858
        %v860 = vrot.slane %v859, 6
        %v861 = vsel %vm699, %v860, %v859
        %v863 = vadd.f32 %v853, %v861
        %s864 = sld [smem:[#allocation7 + $0x5c]]
        %v865 = vstv %s864
        %v866 = vmul.f32 %v645, %v865
        %v868 = vrot.slane %v866, 7
        %v869 = vrot.slane %v868, 2
        %870 = vrot.lane.b32.xlu0 %v869, 32
        %v871 = vpop.permute.xlu0 %870
        %v872 = vrot.slane %v871, 6
        %v873 = vsel %vm699, %v872, %v871
        %v875 = vadd.f32 %v863, %v873
        %s876 = scalar_lea.vmem %s5, 1
        %v877 = vld [vmem:[%s876] ss:$8 sm:$0x3]
        %v880 = vunpack.c.l.s4 857870592
        %v881 = vunpack.c.0.s8 %v880
        %v882 = vlaneseq
        %v883 = vshrl.u32 %v882, 7
        %v884 = vsub.s32 %v881, %v883
        %v885 = vrot.slane %v877, %v884
        %886 = vrot.lane.b32.xlu0 %v885, 78
        %v887 = vpop.permute.xlu0 %886
        %v888 = vrot.slane %v887, 6
        %vm889 = vcmask 637952
        %v890 = vsel %vm889, %v888, %v887
        %v892 = vmul.f32 %v875, %v890
        %894 = vrot.lane.b32.xlu0 %v892, 127
        %v895 = vpop.permute.xlu0 %894
        %v896 = vrot.slane %v895, 2
        %vm897 = vcmask 1039360
        %v898 = vsel %vm897, %v895, %v896
        %v900 = vadd.f32 %v731, %v898
        %s901 = sld [smem:[#allocation7 + $0x2]]
        %v902 = vstv %s901
        %v903 = vmul.f32 %v563, %v902
        %v904 = vadd.f32 %v903, 0.0
        %s905 = sld [smem:[#allocation7 + $0x33]]
        %v906 = vstv %s905
        %v907 = vmul.f32 %v563, %v906
        %v909 = vrot.slane %v907, 7
        %v910 = vrot.slane %v909, 2
        %v912 = vadd.f32 %v904, %v910
        %s913 = sld [smem:[#allocation7 + $0x9]]
        %v914 = vstv %s913
        %v915 = vmul.f32 %v563, %v914
        %917 = vrot.lane.b32.xlu0 %v915, 112
        %v918 = vpop.permute.xlu0 %917
        %v919 = vrot.slane %v918, 2
        %v920 = vsel %vm583, %v918, %v919
        %v922 = vadd.f32 %v912, %v920
        %s923 = sld [smem:[#allocation7 + $0x3a]]
        %v924 = vstv %s923
        %v925 = vmul.f32 %v563, %v924
        %v927 = vrot.slane %v925, 7
        %v928 = vrot.slane %v927, 2
        %929 = vrot.lane.b32.xlu0 %v928, 112
        %v930 = vpop.permute.xlu0 %929
        %v931 = vrot.slane %v930, 2
        %v932 = vsel %vm583, %v930, %v931
        %v934 = vadd.f32 %v922, %v932
        %s935 = sld [smem:[#allocation7 + $0x10]]
        %v936 = vstv %s935
        %v937 = vmul.f32 %v563, %v936
        %939 = vrot.lane.b32.xlu0 %v937, 96
        %v940 = vpop.permute.xlu0 %939
        %v941 = vrot.slane %v940, 2
        %v942 = vsel %vm606, %v940, %v941
        %v944 = vadd.f32 %v934, %v942
        %s945 = sld [smem:[#allocation7 + $0x41]]
        %v946 = vstv %s945
        %v947 = vmul.f32 %v563, %v946
        %v949 = vrot.slane %v947, 7
        %v950 = vrot.slane %v949, 2
        %951 = vrot.lane.b32.xlu0 %v950, 96
        %v952 = vpop.permute.xlu0 %951
        %v953 = vrot.slane %v952, 2
        %v954 = vsel %vm606, %v952, %v953
        %v956 = vadd.f32 %v944, %v954
        %s957 = sld [smem:[#allocation7 + $0x17]]
        %v958 = vstv %s957
        %v959 = vmul.f32 %v563, %v958
        %961 = vrot.lane.b32.xlu0 %v959, 80
        %v962 = vpop.permute.xlu0 %961
        %v963 = vrot.slane %v962, 2
        %v964 = vsel %vm629, %v962, %v963
        %v966 = vadd.f32 %v956, %v964
        %s967 = sld [smem:[#allocation7 + $0x48]]
        %v968 = vstv %s967
        %v969 = vmul.f32 %v563, %v968
        %v971 = vrot.slane %v969, 7
        %v972 = vrot.slane %v971, 2
        %973 = vrot.lane.b32.xlu0 %v972, 80
        %v974 = vpop.permute.xlu0 %973
        %v975 = vrot.slane %v974, 2
        %v976 = vsel %vm629, %v974, %v975
        %v978 = vadd.f32 %v966, %v976
        %s979 = sld [smem:[#allocation7 + $0x1e]]
        %v980 = vstv %s979
        %v981 = vmul.f32 %v645, %v980
        %983 = vrot.lane.b32.xlu0 %v981, 64
        %v984 = vpop.permute.xlu0 %983
        %v985 = vrot.slane %v984, 6
        %v986 = vsel %vm653, %v985, %v984
        %v988 = vadd.f32 %v978, %v986
        %s989 = sld [smem:[#allocation7 + $0x4f]]
        %v990 = vstv %s989
        %v991 = vmul.f32 %v645, %v990
        %v993 = vrot.slane %v991, 7
        %v994 = vrot.slane %v993, 2
        %995 = vrot.lane.b32.xlu0 %v994, 64
        %v996 = vpop.permute.xlu0 %995
        %v997 = vrot.slane %v996, 6
        %v998 = vsel %vm653, %v997, %v996
        %v1000 = vadd.f32 %v988, %v998
        %s1001 = sld [smem:[#allocation7 + $0x25]]
        %v1002 = vstv %s1001
        %v1003 = vmul.f32 %v645, %v1002
        %1005 = vrot.lane.b32.xlu0 %v1003, 48
        %v1006 = vpop.permute.xlu0 %1005
        %v1007 = vrot.slane %v1006, 6
        %v1008 = vsel %vm676, %v1007, %v1006
        %v1010 = vadd.f32 %v1000, %v1008
        %s1011 = sld [smem:[#allocation7 + $0x56]]
        %v1012 = vstv %s1011
        %v1013 = vmul.f32 %v645, %v1012
        %v1015 = vrot.slane %v1013, 7
        %v1016 = vrot.slane %v1015, 2
        %1017 = vrot.lane.b32.xlu0 %v1016, 48
        %v1018 = vpop.permute.xlu0 %1017
        %v1019 = vrot.slane %v1018, 6
        %v1020 = vsel %vm676, %v1019, %v1018
        %v1022 = vadd.f32 %v1010, %v1020
        %s1023 = sld [smem:[#allocation7 + $0x2c]]
        %v1024 = vstv %s1023
        %v1025 = vmul.f32 %v645, %v1024
        %1027 = vrot.lane.b32.xlu0 %v1025, 32
        %v1028 = vpop.permute.xlu0 %1027
        %v1029 = vrot.slane %v1028, 6
        %v1030 = vsel %vm699, %v1029, %v1028
        %v1032 = vadd.f32 %v1022, %v1030
        %s1033 = sld [smem:[#allocation7 + $0x5d]]
        %v1034 = vstv %s1033
        %v1035 = vmul.f32 %v645, %v1034
        %v1037 = vrot.slane %v1035, 7
        %v1038 = vrot.slane %v1037, 2
        %1039 = vrot.lane.b32.xlu0 %v1038, 32
        %v1040 = vpop.permute.xlu0 %1039
        %v1041 = vrot.slane %v1040, 6
        %v1042 = vsel %vm699, %v1041, %v1040
        %v1044 = vadd.f32 %v1032, %v1042
        %s1045 = scalar_lea.vmem %s5, 2
        %v1046 = vld [vmem:[%s1045] ss:$8 sm:$0x3]
        %v1049 = vunpack.c.l.s4 857870592
        %v1050 = vunpack.c.0.s8 %v1049
        %v1051 = vlaneseq
        %v1052 = vshrl.u32 %v1051, 7
        %v1053 = vsub.s32 %v1050, %v1052
        %v1054 = vrot.slane %v1046, %v1053
        %1055 = vrot.lane.b32.xlu0 %v1054, 79
        %v1056 = vpop.permute.xlu0 %1055
        %v1057 = vrot.slane %v1056, 6
        %vm1058 = vcmask 646144
        %v1059 = vsel %vm1058, %v1057, %v1056
        %v1061 = vmul.f32 %v1044, %v1059
        %1063 = vrot.lane.b32.xlu0 %v1061, 126
        %v1064 = vpop.permute.xlu0 %1063
        %v1065 = vrot.slane %v1064, 2
        %vm1066 = vcmask 1031168
        %v1067 = vsel %vm1066, %v1064, %v1065
        %v1069 = vadd.f32 %v900, %v1067
        %s1070 = sld [smem:[#allocation7 + $0x3]]
        %v1071 = vstv %s1070
        %v1072 = vmul.f32 %v563, %v1071
        %v1073 = vadd.f32 %v1072, 0.0
        %s1074 = sld [smem:[#allocation7 + $0x34]]
        %v1075 = vstv %s1074
        %v1076 = vmul.f32 %v563, %v1075
        %v1078 = vrot.slane %v1076, 7
        %v1079 = vrot.slane %v1078, 2
        %v1081 = vadd.f32 %v1073, %v1079
        %s1082 = sld [smem:[#allocation7 + $0xa]]
        %v1083 = vstv %s1082
        %v1084 = vmul.f32 %v563, %v1083
        %1086 = vrot.lane.b32.xlu0 %v1084, 112
        %v1087 = vpop.permute.xlu0 %1086
        %v1088 = vrot.slane %v1087, 2
        %v1089 = vsel %vm583, %v1087, %v1088
        %v1091 = vadd.f32 %v1081, %v1089
        %s1092 = sld [smem:[#allocation7 + $0x3b]]
        %v1093 = vstv %s1092
        %v1094 = vmul.f32 %v563, %v1093
        %v1096 = vrot.slane %v1094, 7
        %v1097 = vrot.slane %v1096, 2
        %1098 = vrot.lane.b32.xlu0 %v1097, 112
        %v1099 = vpop.permute.xlu0 %1098
        %v1100 = vrot.slane %v1099, 2
        %v1101 = vsel %vm583, %v1099, %v1100
        %v1103 = vadd.f32 %v1091, %v1101
        %s1104 = sld [smem:[#allocation7 + $0x11]]
        %v1105 = vstv %s1104
        %v1106 = vmul.f32 %v563, %v1105
        %1108 = vrot.lane.b32.xlu0 %v1106, 96
        %v1109 = vpop.permute.xlu0 %1108
        %v1110 = vrot.slane %v1109, 2
        %v1111 = vsel %vm606, %v1109, %v1110
        %v1113 = vadd.f32 %v1103, %v1111
        %s1114 = sld [smem:[#allocation7 + $0x42]]
        %v1115 = vstv %s1114
        %v1116 = vmul.f32 %v563, %v1115
        %v1118 = vrot.slane %v1116, 7
        %v1119 = vrot.slane %v1118, 2
        %1120 = vrot.lane.b32.xlu0 %v1119, 96
        %v1121 = vpop.permute.xlu0 %1120
        %v1122 = vrot.slane %v1121, 2
        %v1123 = vsel %vm606, %v1121, %v1122
        %v1125 = vadd.f32 %v1113, %v1123
        %v1126 = vld [vmem:[#allocation2 + $0x2] sm:$0xf]
        %s1127 = sld [smem:[#allocation7 + $0x18]]
        %v1128 = vstv %s1127
        %v1129 = vmul.f32 %v1126, %v1128
        %1131 = vrot.lane.b32.xlu0 %v1129, 80
        %v1132 = vpop.permute.xlu0 %1131
        %v1133 = vrot.slane %v1132, 6
        %v1134 = vsel %vm629, %v1133, %v1132
        %v1136 = vadd.f32 %v1125, %v1134
        %s1137 = sld [smem:[#allocation7 + $0x49]]
        %v1138 = vstv %s1137
        %v1139 = vmul.f32 %v1126, %v1138
        %v1141 = vrot.slane %v1139, 7
        %v1142 = vrot.slane %v1141, 2
        %1143 = vrot.lane.b32.xlu0 %v1142, 80
        %v1144 = vpop.permute.xlu0 %1143
        %v1145 = vrot.slane %v1144, 6
        %v1146 = vsel %vm629, %v1145, %v1144
        %v1148 = vadd.f32 %v1136, %v1146
        %s1149 = sld [smem:[#allocation7 + $0x1f]]
        %v1150 = vstv %s1149
        %v1151 = vmul.f32 %v645, %v1150
        %1153 = vrot.lane.b32.xlu0 %v1151, 64
        %v1154 = vpop.permute.xlu0 %1153
        %v1155 = vrot.slane %v1154, 6
        %v1156 = vsel %vm653, %v1155, %v1154
        %v1158 = vadd.f32 %v1148, %v1156
        %s1159 = sld [smem:[#allocation7 + $0x50]]
        %v1160 = vstv %s1159
        %v1161 = vmul.f32 %v645, %v1160
        %v1163 = vrot.slane %v1161, 7
        %v1164 = vrot.slane %v1163, 2
        %1165 = vrot.lane.b32.xlu0 %v1164, 64
        %v1166 = vpop.permute.xlu0 %1165
        %v1167 = vrot.slane %v1166, 6
        %v1168 = vsel %vm653, %v1167, %v1166
        %v1170 = vadd.f32 %v1158, %v1168
        %s1171 = sld [smem:[#allocation7 + $0x26]]
        %v1172 = vstv %s1171
        %v1173 = vmul.f32 %v645, %v1172
        %1175 = vrot.lane.b32.xlu0 %v1173, 48
        %v1176 = vpop.permute.xlu0 %1175
        %v1177 = vrot.slane %v1176, 6
        %v1178 = vsel %vm676, %v1177, %v1176
        %v1180 = vadd.f32 %v1170, %v1178
        %s1181 = sld [smem:[#allocation7 + $0x57]]
        %v1182 = vstv %s1181
        %v1183 = vmul.f32 %v645, %v1182
        %v1185 = vrot.slane %v1183, 7
        %v1186 = vrot.slane %v1185, 2
        %1187 = vrot.lane.b32.xlu0 %v1186, 48
        %v1188 = vpop.permute.xlu0 %1187
        %v1189 = vrot.slane %v1188, 6
        %v1190 = vsel %vm676, %v1189, %v1188
        %v1192 = vadd.f32 %v1180, %v1190
        %s1193 = sld [smem:[#allocation7 + $0x2d]]
        %v1194 = vstv %s1193
        %v1195 = vmul.f32 %v645, %v1194
        %1197 = vrot.lane.b32.xlu0 %v1195, 32
        %v1198 = vpop.permute.xlu0 %1197
        %v1199 = vrot.slane %v1198, 6
        %v1200 = vsel %vm699, %v1199, %v1198
        %v1202 = vadd.f32 %v1192, %v1200
        %s1203 = sld [smem:[#allocation7 + $0x5e]]
        %v1204 = vstv %s1203
        %v1205 = vmul.f32 %v645, %v1204
        %v1207 = vrot.slane %v1205, 7
        %v1208 = vrot.slane %v1207, 2
        %1209 = vrot.lane.b32.xlu0 %v1208, 32
        %v1210 = vpop.permute.xlu0 %1209
        %v1211 = vrot.slane %v1210, 6
        %v1212 = vsel %vm699, %v1211, %v1210
        %v1214 = vadd.f32 %v1202, %v1212
        %s1215 = scalar_lea.vmem %s5, 3
        %v1216 = vld [vmem:[%s1215] ss:$8 sm:$0x3]
        %v1219 = vunpack.c.l.s4 857870592
        %v1220 = vunpack.c.0.s8 %v1219
        %v1221 = vlaneseq
        %v1222 = vshrl.u32 %v1221, 7
        %v1223 = vsub.s32 %v1220, %v1222
        %v1224 = vrot.slane %v1216, %v1223
        %1225 = vrot.lane.b32.xlu0 %v1224, 80
        %v1226 = vpop.permute.xlu0 %1225
        %v1227 = vrot.slane %v1226, 6
        %v1228 = vsel %vm629, %v1227, %v1226
        %v1230 = vmul.f32 %v1214, %v1228
        %1232 = vrot.lane.b32.xlu0 %v1230, 125
        %v1233 = vpop.permute.xlu0 %1232
        %v1234 = vrot.slane %v1233, 2
        %vm1235 = vcmask 1022976
        %v1236 = vsel %vm1235, %v1233, %v1234
        %v1238 = vadd.f32 %v1069, %v1236
        %s1239 = sld [smem:[#allocation7 + $0x4]]
        %v1240 = vstv %s1239
        %v1241 = vmul.f32 %v563, %v1240
        %v1242 = vadd.f32 %v1241, 0.0
        %s1243 = sld [smem:[#allocation7 + $0x35]]
        %v1244 = vstv %s1243
        %v1245 = vmul.f32 %v563, %v1244
        %v1247 = vrot.slane %v1245, 7
        %v1248 = vrot.slane %v1247, 2
        %v1250 = vadd.f32 %v1242, %v1248
        %s1251 = sld [smem:[#allocation7 + $0xb]]
        %v1252 = vstv %s1251
        %v1253 = vmul.f32 %v563, %v1252
        %1255 = vrot.lane.b32.xlu0 %v1253, 112
        %v1256 = vpop.permute.xlu0 %1255
        %v1257 = vrot.slane %v1256, 2
        %v1258 = vsel %vm583, %v1256, %v1257
        %v1260 = vadd.f32 %v1250, %v1258
        %s1261 = sld [smem:[#allocation7 + $0x3c]]
        %v1262 = vstv %s1261
        %v1263 = vmul.f32 %v563, %v1262
        %v1265 = vrot.slane %v1263, 7
        %v1266 = vrot.slane %v1265, 2
        %1267 = vrot.lane.b32.xlu0 %v1266, 112
        %v1268 = vpop.permute.xlu0 %1267
        %v1269 = vrot.slane %v1268, 2
        %v1270 = vsel %vm583, %v1268, %v1269
        %v1272 = vadd.f32 %v1260, %v1270
        %s1273 = sld [smem:[#allocation7 + $0x12]]
        %v1274 = vstv %s1273
        %v1275 = vmul.f32 %v563, %v1274
        %1277 = vrot.lane.b32.xlu0 %v1275, 96
        %v1278 = vpop.permute.xlu0 %1277
        %v1279 = vrot.slane %v1278, 2
        %v1280 = vsel %vm606, %v1278, %v1279
        %v1282 = vadd.f32 %v1272, %v1280
        %s1283 = sld [smem:[#allocation7 + $0x43]]
        %v1284 = vstv %s1283
        %v1285 = vmul.f32 %v563, %v1284
        %v1287 = vrot.slane %v1285, 7
        %v1288 = vrot.slane %v1287, 2
        %1289 = vrot.lane.b32.xlu0 %v1288, 96
        %v1290 = vpop.permute.xlu0 %1289
        %v1291 = vrot.slane %v1290, 2
        %v1292 = vsel %vm606, %v1290, %v1291
        %v1294 = vadd.f32 %v1282, %v1292
        %s1295 = sld [smem:[#allocation7 + $0x19]]
        %v1296 = vstv %s1295
        %v1297 = vmul.f32 %v645, %v1296
        %1299 = vrot.lane.b32.xlu0 %v1297, 80
        %v1300 = vpop.permute.xlu0 %1299
        %v1301 = vrot.slane %v1300, 6
        %v1302 = vsel %vm629, %v1301, %v1300
        %v1304 = vadd.f32 %v1294, %v1302
        %s1305 = sld [smem:[#allocation7 + $0x4a]]
        %v1306 = vstv %s1305
        %v1307 = vmul.f32 %v645, %v1306
        %v1309 = vrot.slane %v1307, 7
        %v1310 = vrot.slane %v1309, 2
        %1311 = vrot.lane.b32.xlu0 %v1310, 80
        %v1312 = vpop.permute.xlu0 %1311
        %v1313 = vrot.slane %v1312, 6
        %v1314 = vsel %vm629, %v1313, %v1312
        %v1316 = vadd.f32 %v1304, %v1314
        %s1317 = sld [smem:[#allocation7 + $0x20]]
        %v1318 = vstv %s1317
        %v1319 = vmul.f32 %v645, %v1318
        %1321 = vrot.lane.b32.xlu0 %v1319, 64
        %v1322 = vpop.permute.xlu0 %1321
        %v1323 = vrot.slane %v1322, 6
        %v1324 = vsel %vm653, %v1323, %v1322
        %v1326 = vadd.f32 %v1316, %v1324
        %s1327 = sld [smem:[#allocation7 + $0x51]]
        %v1328 = vstv %s1327
        %v1329 = vmul.f32 %v645, %v1328
        %v1331 = vrot.slane %v1329, 7
        %v1332 = vrot.slane %v1331, 2
        %1333 = vrot.lane.b32.xlu0 %v1332, 64
        %v1334 = vpop.permute.xlu0 %1333
        %v1335 = vrot.slane %v1334, 6
        %v1336 = vsel %vm653, %v1335, %v1334
        %v1338 = vadd.f32 %v1326, %v1336
        %s1339 = sld [smem:[#allocation7 + $0x27]]
        %v1340 = vstv %s1339
        %v1341 = vmul.f32 %v645, %v1340
        %1343 = vrot.lane.b32.xlu0 %v1341, 48
        %v1344 = vpop.permute.xlu0 %1343
        %v1345 = vrot.slane %v1344, 6
        %v1346 = vsel %vm676, %v1345, %v1344
        %v1348 = vadd.f32 %v1338, %v1346
        %s1349 = sld [smem:[#allocation7 + $0x58]]
        %v1350 = vstv %s1349
        %v1351 = vmul.f32 %v645, %v1350
        %v1353 = vrot.slane %v1351, 7
        %v1354 = vrot.slane %v1353, 2
        %1355 = vrot.lane.b32.xlu0 %v1354, 48
        %v1356 = vpop.permute.xlu0 %1355
        %v1357 = vrot.slane %v1356, 6
        %v1358 = vsel %vm676, %v1357, %v1356
        %v1360 = vadd.f32 %v1348, %v1358
        %s1361 = sld [smem:[#allocation7 + $0x2e]]
        %v1362 = vstv %s1361
        %v1363 = vmul.f32 %v645, %v1362
        %1365 = vrot.lane.b32.xlu0 %v1363, 32
        %v1366 = vpop.permute.xlu0 %1365
        %v1367 = vrot.slane %v1366, 6
        %v1368 = vsel %vm699, %v1367, %v1366
        %v1370 = vadd.f32 %v1360, %v1368
        %s1371 = sld [smem:[#allocation7 + $0x5f]]
        %v1372 = vstv %s1371
        %v1373 = vmul.f32 %v645, %v1372
        %v1375 = vrot.slane %v1373, 7
        %v1376 = vrot.slane %v1375, 2
        %1377 = vrot.lane.b32.xlu0 %v1376, 32
        %v1378 = vpop.permute.xlu0 %1377
        %v1379 = vrot.slane %v1378, 6
        %v1380 = vsel %vm699, %v1379, %v1378
        %v1382 = vadd.f32 %v1370, %v1380
        %s1383 = scalar_lea.vmem %s5, 4
        %v1384 = vld [vmem:[%s1383] ss:$8 sm:$0x3]
        %v1387 = vunpack.c.l.s4 857870592
        %v1388 = vunpack.c.0.s8 %v1387
        %v1389 = vlaneseq
        %v1390 = vshrl.u32 %v1389, 7
        %v1391 = vsub.s32 %v1388, %v1390
        %v1392 = vrot.slane %v1384, %v1391
        %1393 = vrot.lane.b32.xlu0 %v1392, 81
        %v1394 = vpop.permute.xlu0 %1393
        %v1395 = vrot.slane %v1394, 6
        %vm1396 = vcmask 662528
        %v1397 = vsel %vm1396, %v1395, %v1394
        %v1399 = vmul.f32 %v1382, %v1397
        %1401 = vrot.lane.b32.xlu0 %v1399, 124
        %v1402 = vpop.permute.xlu0 %1401
        %v1403 = vrot.slane %v1402, 2
        %vm1404 = vcmask 1014784
        %v1405 = vsel %vm1404, %v1402, %v1403
        %v1407 = vadd.f32 %v1238, %v1405
        %s1408 = sld [smem:[#allocation7 + $0x5]]
        %v1409 = vstv %s1408
        %v1410 = vmul.f32 %v563, %v1409
        %v1411 = vadd.f32 %v1410, 0.0
        %s1412 = sld [smem:[#allocation7 + $0x36]]
        %v1413 = vstv %s1412
        %v1414 = vmul.f32 %v563, %v1413
        %v1416 = vrot.slane %v1414, 7
        %v1417 = vrot.slane %v1416, 2
        %v1419 = vadd.f32 %v1411, %v1417
        %s1420 = sld [smem:[#allocation7 + $0xc]]
        %v1421 = vstv %s1420
        %v1422 = vmul.f32 %v563, %v1421
        %1424 = vrot.lane.b32.xlu0 %v1422, 112
        %v1425 = vpop.permute.xlu0 %1424
        %v1426 = vrot.slane %v1425, 2
        %v1427 = vsel %vm583, %v1425, %v1426
        %v1429 = vadd.f32 %v1419, %v1427
        %s1430 = sld [smem:[#allocation7 + $0x3d]]
        %v1431 = vstv %s1430
        %v1432 = vmul.f32 %v563, %v1431
        %v1434 = vrot.slane %v1432, 7
        %v1435 = vrot.slane %v1434, 2
        %1436 = vrot.lane.b32.xlu0 %v1435, 112
        %v1437 = vpop.permute.xlu0 %1436
        %v1438 = vrot.slane %v1437, 2
        %v1439 = vsel %vm583, %v1437, %v1438
        %v1441 = vadd.f32 %v1429, %v1439
        %s1442 = sld [smem:[#allocation7 + $0x13]]
        %v1443 = vstv %s1442
        %v1444 = vmul.f32 %v563, %v1443
        %1446 = vrot.lane.b32.xlu0 %v1444, 96
        %v1447 = vpop.permute.xlu0 %1446
        %v1448 = vrot.slane %v1447, 2
        %v1449 = vsel %vm606, %v1447, %v1448
        %v1451 = vadd.f32 %v1441, %v1449
        %s1452 = sld [smem:[#allocation7 + $0x44]]
        %v1453 = vstv %s1452
        %v1454 = vmul.f32 %v563, %v1453
        %v1456 = vrot.slane %v1454, 7
        %v1457 = vrot.slane %v1456, 2
        %1458 = vrot.lane.b32.xlu0 %v1457, 96
        %v1459 = vpop.permute.xlu0 %1458
        %v1460 = vrot.slane %v1459, 2
        %v1461 = vsel %vm606, %v1459, %v1460
        %v1463 = vadd.f32 %v1451, %v1461
        %s1464 = sld [smem:[#allocation7 + $0x1a]]
        %v1465 = vstv %s1464
        %v1466 = vmul.f32 %v645, %v1465
        %1468 = vrot.lane.b32.xlu0 %v1466, 80
        %v1469 = vpop.permute.xlu0 %1468
        %v1470 = vrot.slane %v1469, 6
        %v1471 = vsel %vm629, %v1470, %v1469
        %v1473 = vadd.f32 %v1463, %v1471
        %s1474 = sld [smem:[#allocation7 + $0x4b]]
        %v1475 = vstv %s1474
        %v1476 = vmul.f32 %v645, %v1475
        %v1478 = vrot.slane %v1476, 7
        %v1479 = vrot.slane %v1478, 2
        %1480 = vrot.lane.b32.xlu0 %v1479, 80
        %v1481 = vpop.permute.xlu0 %1480
        %v1482 = vrot.slane %v1481, 6
        %v1483 = vsel %vm629, %v1482, %v1481
        %v1485 = vadd.f32 %v1473, %v1483
        %s1486 = sld [smem:[#allocation7 + $0x21]]
        %v1487 = vstv %s1486
        %v1488 = vmul.f32 %v645, %v1487
        %1490 = vrot.lane.b32.xlu0 %v1488, 64
        %v1491 = vpop.permute.xlu0 %1490
        %v1492 = vrot.slane %v1491, 6
        %v1493 = vsel %vm653, %v1492, %v1491
        %v1495 = vadd.f32 %v1485, %v1493
        %s1496 = sld [smem:[#allocation7 + $0x52]]
        %v1497 = vstv %s1496
        %v1498 = vmul.f32 %v645, %v1497
        %v1500 = vrot.slane %v1498, 7
        %v1501 = vrot.slane %v1500, 2
        %1502 = vrot.lane.b32.xlu0 %v1501, 64
        %v1503 = vpop.permute.xlu0 %1502
        %v1504 = vrot.slane %v1503, 6
        %v1505 = vsel %vm653, %v1504, %v1503
        %v1507 = vadd.f32 %v1495, %v1505
        %s1508 = sld [smem:[#allocation7 + $0x28]]
        %v1509 = vstv %s1508
        %v1510 = vmul.f32 %v645, %v1509
        %1512 = vrot.lane.b32.xlu0 %v1510, 48
        %v1513 = vpop.permute.xlu0 %1512
        %v1514 = vrot.slane %v1513, 6
        %v1515 = vsel %vm676, %v1514, %v1513
        %v1517 = vadd.f32 %v1507, %v1515
        %s1518 = sld [smem:[#allocation7 + $0x59]]
        %v1519 = vstv %s1518
        %v1520 = vmul.f32 %v645, %v1519
        %v1522 = vrot.slane %v1520, 7
        %v1523 = vrot.slane %v1522, 2
        %1524 = vrot.lane.b32.xlu0 %v1523, 48
        %v1525 = vpop.permute.xlu0 %1524
        %v1526 = vrot.slane %v1525, 6
        %v1527 = vsel %vm676, %v1526, %v1525
        %v1529 = vadd.f32 %v1517, %v1527
        %s1530 = sld [smem:[#allocation7 + $0x2f]]
        %v1531 = vstv %s1530
        %v1532 = vmul.f32 %v645, %v1531
        %1534 = vrot.lane.b32.xlu0 %v1532, 32
        %v1535 = vpop.permute.xlu0 %1534
        %v1536 = vrot.slane %v1535, 6
        %v1537 = vsel %vm699, %v1536, %v1535
        %v1539 = vadd.f32 %v1529, %v1537
        %s1540 = sld [smem:[#allocation7 + $0x60]]
        %v1541 = vstv %s1540
        %v1542 = vmul.f32 %v645, %v1541
        %v1544 = vrot.slane %v1542, 7
        %v1545 = vrot.slane %v1544, 2
        %1546 = vrot.lane.b32.xlu0 %v1545, 32
        %v1547 = vpop.permute.xlu0 %1546
        %v1548 = vrot.slane %v1547, 6
        %v1549 = vsel %vm699, %v1548, %v1547
        %v1551 = vadd.f32 %v1539, %v1549
        %s1552 = scalar_lea.vmem %s5, 5
        %v1553 = vld [vmem:[%s1552] ss:$8 sm:$0x3]
        %v1556 = vunpack.c.l.s4 857870592
        %v1557 = vunpack.c.0.s8 %v1556
        %v1558 = vlaneseq
        %v1559 = vshrl.u32 %v1558, 7
        %v1560 = vsub.s32 %v1557, %v1559
        %v1561 = vrot.slane %v1553, %v1560
        %1562 = vrot.lane.b32.xlu0 %v1561, 82
        %v1563 = vpop.permute.xlu0 %1562
        %v1564 = vrot.slane %v1563, 6
        %vm1565 = vcmask 670720
        %v1566 = vsel %vm1565, %v1564, %v1563
        %v1568 = vmul.f32 %v1551, %v1566
        %1570 = vrot.lane.b32.xlu0 %v1568, 123
        %v1571 = vpop.permute.xlu0 %1570
        %v1572 = vrot.slane %v1571, 2
        %vm1573 = vcmask 1006592
        %v1574 = vsel %vm1573, %v1571, %v1572
        %v1576 = vadd.f32 %v1407, %v1574
        %s1577 = sld [smem:[#allocation7 + $0x6]]
        %v1578 = vstv %s1577
        %v1579 = vmul.f32 %v563, %v1578
        %v1580 = vadd.f32 %v1579, 0.0
        %s1581 = sld [smem:[#allocation7 + $0x37]]
        %v1582 = vstv %s1581
        %v1583 = vmul.f32 %v563, %v1582
        %v1585 = vrot.slane %v1583, 7
        %v1586 = vrot.slane %v1585, 2
        %v1588 = vadd.f32 %v1580, %v1586
        %s1589 = sld [smem:[#allocation7 + $0xd]]
        %v1590 = vstv %s1589
        %v1591 = vmul.f32 %v563, %v1590
        %1593 = vrot.lane.b32.xlu0 %v1591, 112
        %v1594 = vpop.permute.xlu0 %1593
        %v1595 = vrot.slane %v1594, 2
        %v1596 = vsel %vm583, %v1594, %v1595
        %v1598 = vadd.f32 %v1588, %v1596
        %s1599 = sld [smem:[#allocation7 + $0x3e]]
        %v1600 = vstv %s1599
        %v1601 = vmul.f32 %v563, %v1600
        %v1603 = vrot.slane %v1601, 7
        %v1604 = vrot.slane %v1603, 2
        %1605 = vrot.lane.b32.xlu0 %v1604, 112
        %v1606 = vpop.permute.xlu0 %1605
        %v1607 = vrot.slane %v1606, 2
        %v1608 = vsel %vm583, %v1606, %v1607
        %v1610 = vadd.f32 %v1598, %v1608
        %s1611 = sld [smem:[#allocation7 + $0x14]]
        %v1612 = vstv %s1611
        %v1613 = vmul.f32 %v563, %v1612
        %1615 = vrot.lane.b32.xlu0 %v1613, 96
        %v1616 = vpop.permute.xlu0 %1615
        %v1617 = vrot.slane %v1616, 2
        %v1618 = vsel %vm606, %v1616, %v1617
        %v1620 = vadd.f32 %v1610, %v1618
        %s1621 = sld [smem:[#allocation7 + $0x45]]
        %v1622 = vstv %s1621
        %v1623 = vmul.f32 %v563, %v1622
        %v1625 = vrot.slane %v1623, 7
        %v1626 = vrot.slane %v1625, 2
        %1627 = vrot.lane.b32.xlu0 %v1626, 96
        %v1628 = vpop.permute.xlu0 %1627
        %v1629 = vrot.slane %v1628, 2
        %v1630 = vsel %vm606, %v1628, %v1629
        %v1632 = vadd.f32 %v1620, %v1630
        %s1633 = sld [smem:[#allocation7 + $0x1b]]
        %v1634 = vstv %s1633
        %v1635 = vmul.f32 %v645, %v1634
        %1637 = vrot.lane.b32.xlu0 %v1635, 80
        %v1638 = vpop.permute.xlu0 %1637
        %v1639 = vrot.slane %v1638, 6
        %v1640 = vsel %vm629, %v1639, %v1638
        %v1642 = vadd.f32 %v1632, %v1640
        %s1643 = sld [smem:[#allocation7 + $0x4c]]
        %v1644 = vstv %s1643
        %v1645 = vmul.f32 %v645, %v1644
        %v1647 = vrot.slane %v1645, 7
        %v1648 = vrot.slane %v1647, 2
        %1649 = vrot.lane.b32.xlu0 %v1648, 80
        %v1650 = vpop.permute.xlu0 %1649
        %v1651 = vrot.slane %v1650, 6
        %v1652 = vsel %vm629, %v1651, %v1650
        %v1654 = vadd.f32 %v1642, %v1652
        %s1655 = sld [smem:[#allocation7 + $0x22]]
        %v1656 = vstv %s1655
        %v1657 = vmul.f32 %v645, %v1656
        %1659 = vrot.lane.b32.xlu0 %v1657, 64
        %v1660 = vpop.permute.xlu0 %1659
        %v1661 = vrot.slane %v1660, 6
        %v1662 = vsel %vm653, %v1661, %v1660
        %v1664 = vadd.f32 %v1654, %v1662
        %s1665 = sld [smem:[#allocation7 + $0x53]]
        %v1666 = vstv %s1665
        %v1667 = vmul.f32 %v645, %v1666
        %v1669 = vrot.slane %v1667, 7
        %v1670 = vrot.slane %v1669, 2
        %1671 = vrot.lane.b32.xlu0 %v1670, 64
        %v1672 = vpop.permute.xlu0 %1671
        %v1673 = vrot.slane %v1672, 6
        %v1674 = vsel %vm653, %v1673, %v1672
        %v1676 = vadd.f32 %v1664, %v1674
        %s1677 = sld [smem:[#allocation7 + $0x29]]
        %v1678 = vstv %s1677
        %v1679 = vmul.f32 %v645, %v1678
        %1681 = vrot.lane.b32.xlu0 %v1679, 48
        %v1682 = vpop.permute.xlu0 %1681
        %v1683 = vrot.slane %v1682, 6
        %v1684 = vsel %vm676, %v1683, %v1682
        %v1686 = vadd.f32 %v1676, %v1684
        %s1687 = sld [smem:[#allocation7 + $0x5a]]
        %v1688 = vstv %s1687
        %v1689 = vmul.f32 %v645, %v1688
        %v1691 = vrot.slane %v1689, 7
        %v1692 = vrot.slane %v1691, 2
        %1693 = vrot.lane.b32.xlu0 %v1692, 48
        %v1694 = vpop.permute.xlu0 %1693
        %v1695 = vrot.slane %v1694, 6
        %v1696 = vsel %vm676, %v1695, %v1694
        %v1698 = vadd.f32 %v1686, %v1696
        %s1699 = sld [smem:[#allocation7 + $0x30]]
        %v1700 = vstv %s1699
        %v1701 = vmul.f32 %v645, %v1700
        %1703 = vrot.lane.b32.xlu0 %v1701, 32
        %v1704 = vpop.permute.xlu0 %1703
        %v1705 = vrot.slane %v1704, 6
        %v1706 = vsel %vm699, %v1705, %v1704
        %v1708 = vadd.f32 %v1698, %v1706
        %s1709 = sld [smem:[#allocation7 + $0x61]]
        %v1710 = vstv %s1709
        %v1711 = vmul.f32 %v645, %v1710
        %v1713 = vrot.slane %v1711, 7
        %v1714 = vrot.slane %v1713, 2
        %1715 = vrot.lane.b32.xlu0 %v1714, 32
        %v1716 = vpop.permute.xlu0 %1715
        %v1717 = vrot.slane %v1716, 6
        %v1718 = vsel %vm699, %v1717, %v1716
        %v1720 = vadd.f32 %v1708, %v1718
        %s1721 = scalar_lea.vmem %s5, 6
        %v1722 = vld [vmem:[%s1721] ss:$8 sm:$0x3]
        %v1725 = vunpack.c.l.s4 857870592
        %v1726 = vunpack.c.0.s8 %v1725
        %v1727 = vlaneseq
        %v1728 = vshrl.u32 %v1727, 7
        %v1729 = vsub.s32 %v1726, %v1728
        %v1730 = vrot.slane %v1722, %v1729
        %1731 = vrot.lane.b32.xlu0 %v1730, 83
        %v1732 = vpop.permute.xlu0 %1731
        %v1733 = vrot.slane %v1732, 6
        %vm1734 = vcmask 678912
        %v1735 = vsel %vm1734, %v1733, %v1732
        %v1737 = vmul.f32 %v1720, %v1735
        %1739 = vrot.lane.b32.xlu0 %v1737, 122
        %v1740 = vpop.permute.xlu0 %1739
        %v1741 = vrot.slane %v1740, 2
        %vm1742 = vcmask 998400
        %v1743 = vsel %vm1742, %v1740, %v1741
        %v1745 = vadd.f32 %v1576, %v1743
        %v1746 = vxor.u32 %v1745, 2147483648
        %v1747 = vmul.f32 %v1746, 1.442695
        %v1748 = vpow.pop %v1747
        %v1749 = vadd.f32 %v1748, 1.0
        %v1750 = vrcp.pop %v1749
        %v1751 = vmul.f32 1.0, %v1750
        %v1753 = vlaneseq
        %v1754 = vshrl.u32 %v1753, 7
        %v1755 = vsub.s32 0, %v1754
        %v1756 = vrot.slane %v1751, %v1755
        %v1757 = vlaneseq
        %v1758 = vshrl.u32 %v1757, 7
        %v1759 = vsub.s32 2, %v1758
        %v1760 = vrot.slane %v1751, %v1759
        %v1761 = vlaneseq
        %v1762 = vshrl.u32 %v1761, 7
        %v1763 = vsub.s32 4, %v1762
        %v1764 = vrot.slane %v1751, %v1763
        %v1768 = vlaneseq
        %v1769 = vshrl.u32 %v1768, 7
        %v1770 = vsub.s32 0, %v1769
        %v1771 = vrot.slane %v1756, %v1770
        %v1772 = vlaneseq
        %v1773 = vshrl.u32 %v1772, 7
        %v1774 = vsub.s32 0, %v1773
        %v1775 = vrot.slane %v1760, %v1774
        %v1776 = vlaneseq
        %v1777 = vshrl.u32 %v1776, 7
        %v1778 = vsub.s32 0, %v1777
        %v1779 = vrot.slane %v1764, %v1778
        %1783 = vrot.lane.b32.xlu0 %v1771, 51
        %v1784 = vpop.permute.xlu0 %1783
        %1785 = vrot.lane.b32.xlu0 %v1775, 51
        %v1786 = vpop.permute.xlu0 %1785
        %1787 = vrot.lane.b32.xlu0 %v1779, 51
        %v1788 = vpop.permute.xlu0 %1787
        %vm1789 = vcmask 416768
        %v1790 = vsel %vm1789, %v1784, %v1786
        %v1791 = vsel %vm1789, %v1786, %v1788
        %v1794 = vmul.f32 %v472, %v1790
        %v1795 = vmul.f32 %v473, %v1791
        %v1796 = vmul.f32 %v474, %v1790
        %v1797 = vmul.f32 %v475, %v1791
        %v1798 = vmul.f32 %v476, %v1790
        %v1799 = vmul.f32 %v477, %v1791
        %v1800 = vmul.f32 %v478, %v1790
        %v1801 = vmul.f32 %v479, %v1791
        %1802 = vst [vmem:[%s310] sm:$0xff] %v1794
        %1803 = vst [vmem:[%s310 + $0x8] sm:$0xff] %v1795
        %1804 = vst [vmem:[%s310 + $0x10] sm:$0xff] %v1796
        %1805 = vst [vmem:[%s310 + $0x18] sm:$0xff] %v1797
        %1806 = vst [vmem:[%s310 + $0x20] sm:$0xff] %v1798
        %1807 = vst [vmem:[%s310 + $0x28] sm:$0xff] %v1799
        %1808 = vst [vmem:[%s310 + $0x30] sm:$0xff] %v1800
        %1809 = vst [vmem:[%s310 + $0x38] sm:$0xff] %v1801
        %s1810 = sand.u32 %s185, 1
        %s1811 = scalar_lea.sflag [#allocation5], %s1810
        %s1812 = sand.u32 %s185, 1
        %s1813 = smul.addr %s1812, 64
        %s1814 = scalar_lea.vmem [#allocation8], %s1813
        // Predicated region
        $region57: #{tpu_custom_call.1} parent=47 // pred_check
          %p1815 = pneg %p195
        $region58: #{tpu_custom_call.1} parent=47 // pred_check_branch
          %1817 = sbr.rel (%p1815) target = $region60
        $region59: #{tpu_custom_call.1} parent=47 // pred_region
          %s1819 = ssub.s32 1024, 1024
          %1820 = vsyncadd %s1811, %s1819
          %s1821 = smul.addr %s25, 8
          %s1822 = smul.addr %s1821, 128
          %s1823 = scalar_lea.hbm %s7, %s1822
          %s1824 = sshll.u32 %s1814, 4
          %s1825 = int_to_ptr.vmem [resolvable:$true] %s1824
          %1830 = dma.vmem_to_hbm [thread:$0]  %s1825, 1024, %s1823, %s1811, 256, 256, 16
        $region60: #{tpu_custom_call.1} parent=47 // pred_fallthru
          _
      $region48: #{tpu_custom_call.1} parent=5 // pred_fallthru
        _
      %p1831 = scmp.le.s32.totalorder 2, %s20
      // Predicated region
      $region61: #{tpu_custom_call.1} parent=5 // pred_check
        %p1832 = pneg %p1831
      $region62: #{tpu_custom_call.1} parent=5 // pred_check_branch
        %1834 = sbr.rel (%p1832) target = $region64
      $region63: #{tpu_custom_call.1} parent=5 // pred_region
        %s1835 = ssub.s32 %s20, 2
        // Predicated region
        $region65: #{tpu_custom_call.1} parent=63 // pred_check
          %p1836 = pneg %p201
        $region66: #{tpu_custom_call.1} parent=63 // pred_check_branch
          %1838 = sbr.rel (%p1836) target = $region68
        $region67: #{tpu_custom_call.1} parent=63 // pred_region
          %s1839 = sand.u32 %s186, 1
          %s1840 = scalar_lea.sflag [#allocation5], %s1839
          %s1841 = sand.u32 %s186, 1
          %s1842 = smul.addr %s1841, 64
          %s1843 = scalar_lea.vmem [#allocation8], %s1842
          %1844 = dma.done %s1840, 1024
        $region68: #{tpu_custom_call.1} parent=63 // pred_fallthru
          _
      $region64: #{tpu_custom_call.1} parent=5 // pred_fallthru
        _
    $region6: #{tpu_custom_call.1} parent=1 // loop_footer
      %s24 = sadd.s32 1, %s20
    $region7: #{tpu_custom_call.1} parent=1 // loop_footer_branch
      %19 = sbr.rel target = $region3
    $region8: #{tpu_custom_call.1} parent=1 // loop_exit
      _
    %1845 = vsyncpa [#allocation4], 1
    %s1846 = scalar_lea.sflag [#allocation4], 1
    %1847 = vsyncpa %s1846, 1
    %1848 = vsyncpa [#allocation5], 1
    %s1849 = scalar_lea.sflag [#allocation5], 1
    %1850 = vsyncpa %s1849, 1
    %1851 = vsyncpa [#allocation6], 1
    %s1852 = scalar_lea.sflag [#allocation6], 1
    %1853 = vsyncpa %s1852, 1

</llo_original>
